<compile_context>
chip_gen: v7x
topology: tpu7x:2x2x1
jax: 0.10.0
libtpu: 0.0.40
codegen_flags: <defaults>
</compile_context>

<pallas_src>
import functools

import jax
import jax.numpy as jnp
from jax import lax
from jax.experimental import pallas as pl
from jax.experimental.pallas import tpu as pltpu


def _fused_kernel(x_ref, z_ref, wkv_ref, bkv_ref, wo3_ref, o_ref, *,
                  b, heads, c, m, d, L, inner):
    """K/V projection + per-head attention + output projection, all batches."""
    mh = m // heads  # z-rows owned by one head under the raw .view reinterpret

    # ---- one fused [scale*K | V] projection for every batch -----------------
    z2 = z_ref[...].reshape(b * m, d)                   # leading-dim merge (free)
    kv = jnp.dot(z2, wkv_ref[...],
                 preferred_element_type=jnp.float32) + bkv_ref[...]   # (b*m, 2*inner)

    for bi in range(b):                                 # static unroll; grid collapsed
        kvb = kv[bi * m:(bi + 1) * m, :]                # (m, 2*inner)
        xcl = x_ref[bi]                                 # (c, L): q in native lane-dense layout

        # K regrouped as (heads*m, c).  Row order is (column-block a, z-row) which
        # is a permutation of torch's per-head m' order; softmax and the attention
        # weighted sum are order-invariant, only the per-head grouping must match.
        k_cat = jnp.concatenate(
            [kvb[:, a * c:(a + 1) * c] for a in range(heads)], axis=0)  # (heads*m, c)
        s = jnp.dot(k_cat, xcl, preferred_element_type=jnp.float32)     # (heads*m, L)

        p_parts = []
        vwo_parts = []
        for h in range(heads):
            # logits of head h = z-rows [h*mh, (h+1)*mh) taken from every a-block
            s_h = jnp.concatenate(
                [s[a * m + h * mh: a * m + (h + 1) * mh, :] for a in range(heads)],
                axis=0)                                  # (m, L)
            s_h = s_h - jnp.max(s_h, axis=0, keepdims=True)
            e = jnp.exp(s_h)
            inv = pl.reciprocal(jnp.sum(e, axis=0, keepdims=True), approx=False)
            p_parts.append(e * inv)                      # (m, L)
            # V rows of head h with the per-head output projection folded in
            # (tiny (mh,c)@(c,c) matmuls), same (a, z-row) row order as p.
            vwo_parts.append(jnp.concatenate(
                [jnp.dot(kvb[h * mh:(h + 1) * mh, inner + a * c: inner + (a + 1) * c],
                         wo3_ref[h], preferred_element_type=jnp.float32)
                 for a in range(heads)],
                axis=0))                                 # (m, c)

        p_cat = jnp.concatenate(p_parts, axis=0)         # (heads*m, L)
        vwo_cat = jnp.concatenate(vwo_parts, axis=0)     # (heads*m, c)
        # attn @ (V @ Wo) for all heads at once, already transposed: (c, L).
        o_ref[bi] = lax.dot_general(vwo_cat, p_cat, (((0,), (0,)), ((), ())),
                                    preferred_element_type=jnp.float32)


def prepare_params(params, heads, channel):
    """One-time weight prep, hoisted out of the per-call path.

    Fuses Wk|Wv into one matrix and folds `scale` into the K half.  (Wo can NOT
    be pre-folded into Wv under torch's raw .view(b, heads, m, c) reinterpret,
    so Wo is applied per head inside the kernel instead.)
    """
    wk, bk, wv, bv, wo, bo = params
    scale = channel ** (-0.5)
    inner = heads * channel
    wkv = jnp.concatenate([wk * scale, wv], axis=1)                 # (d, 2*inner)
    bkv = jnp.concatenate([bk * scale, bv]).reshape(1, 2 * inner)   # (1, 2*inner)
    wo3 = wo.reshape(heads, channel, channel)                       # (heads, c, c)
    return wkv, bkv, wo3, bo


@functools.partial(jax.jit, static_argnames=("heads",))
def former2mobile_forward(x, z, prepared, heads):
    wkv, bkv, wo3, bo = prepared
    b, c, hh, ww = x.shape
    _, m, d = z.shape
    L = hh * ww
    inner = heads * c
    assert m % heads == 0, "kernel fast path assumes heads | m (as in Mobile-Former)"

    kernel = functools.partial(_fused_kernel, b=b, heads=heads, c=c, m=m, d=d,
                               L=L, inner=inner)
    # Single grid step: the whole problem (a few KiB) is VMEM-resident at once.
    # TODO(synk): on v7x, split the batch over the two TensorCores with
    # pltpu.CORE_PARALLEL / pl.core_map instead of the collapsed grid.
    out_t = pl.pallas_call(
        kernel,
        out_shape=jax.ShapeDtypeStruct((b, c, L), jnp.float32),
        grid=(1,),
        in_specs=[
            pl.BlockSpec((b, c, L), lambda i: (0, 0, 0)),       # x as (b, c, L)
            pl.BlockSpec((b, m, d), lambda i: (0, 0, 0)),       # z
            pl.BlockSpec((d, 2 * inner), lambda i: (0, 0)),     # [scale*Wk | Wv]
            pl.BlockSpec((1, 2 * inner), lambda i: (0, 0)),     # [scale*bk | bv]
            pl.BlockSpec((heads, c, c), lambda i: (0, 0, 0)),   # Wo per head
        ],
        out_specs=pl.BlockSpec((b, c, L), lambda i: (0, 0, 0)),
        compiler_params=pltpu.CompilerParams(dimension_semantics=("arbitrary",)),
    )(x.reshape(b, c, L), z, wkv, bkv, wo3)

    # PyTorch epilogue: out.view(b, c, h, w) is a raw reinterpret of the
    # (b, L, c)-ordered tensor; bo + reinterpret + residual fuse into one tiny
    # XLA op here, keeping the kernel's stores lane-dense and unmasked.
    out_lc = jnp.transpose(out_t, (0, 2, 1)) + bo                   # (b, L, c)
    return x + out_lc.reshape(b, c, hh, ww)


def reference(x, z, wk, bk, wv, bv, wo, bo, heads):
    """Pure-JAX replica of the PyTorch forward (eval mode); f32-HIGHEST ground truth."""
    b, c, h, w = x.shape
    _, m, d = z.shape
    L = h * w
    scale = c ** (-0.5)
    hp = lax.Precision.HIGHEST
    q = jnp.transpose(x.reshape(b, c, L), (0, 2, 1))[:, None]           # (b, 1, L, c)
    k = (jnp.matmul(z, wk, precision=hp) + bk).reshape(b, heads, m, c)  # raw .view
    v = (jnp.matmul(z, wv, precision=hp) + bv).reshape(b, heads, m, c)
    dots = jnp.matmul(q, jnp.swapaxes(k, 2, 3), precision=hp) * scale   # (b, heads, L, m)
    dots = dots - jnp.max(dots, axis=-1, keepdims=True)
    e = jnp.exp(dots)
    attn = e / jnp.sum(e, axis=-1, keepdims=True)
    out = jnp.matmul(attn, v, precision=hp)                             # (b, heads, L, c)
    out = jnp.transpose(out, (0, 2, 1, 3)).reshape(b, L, heads * c)     # rearrange
    out = jnp.matmul(out, wo, precision=hp) + bo                        # dropout = identity
    return x + out.reshape(b, c, h, w)


if __name__ == "__main__":
    b, c, hh, ww = 2, 4, 16, 16        # x: (b, channel, h, w)
    m, d, heads = 8, 32, 2             # z: (b, m, dim); inner_dim = heads * channel
    inner = heads * c

    key = jax.random.PRNGKey(0)
    ks = jax.random.split(key, 8)
    x = jax.random.normal(ks[0], (b, c, hh, ww), jnp.float32)
    z = jax.random.normal(ks[1], (b, m, d), jnp.float32)
    wk = jax.random.normal(ks[2], (d, inner), jnp.float32) * 0.1
    bk = jax.random.normal(ks[3], (inner,), jnp.float32) * 0.1
    wv = jax.random.normal(ks[4], (d, inner), jnp.float32) * 0.1
    bv = jax.random.normal(ks[5], (inner,), jnp.float32) * 0.1
    wo = jax.random.normal(ks[6], (inner, c), jnp.float32) * 0.1
    bo = jax.random.normal(ks[7], (c,), jnp.float32) * 0.1

    prepared = prepare_params((wk, bk, wv, bv, wo, bo), heads, c)  # once, not per call
    out = former2mobile_forward(x, z, prepared, heads=heads)
    out = jax.block_until_ready(out)

    ref = reference(x, z, wk, bk, wv, bv, wo, bo, heads)
    assert out.shape == x.shape
    err = float(jnp.max(jnp.abs(out - ref)))
    # Kernel matmuls run at default MXU precision (bf16 inputs, f32 accumulate)
    # while the reference is f32-HIGHEST; at these O(1) magnitudes that bounds
    # the difference far below 2e-2.  Interpret/CPU runs agree to ~1e-6.
    assert err < 2e-2, err
    print("KERNEL_OK")
</pallas_src>

<mosaic_0001>
module attributes {stable_mosaic.version = 11 : i64} {
  func.func @_fused_kernel(%arg0: i32, %arg1: memref<2x4x256xf32, #tpu.memory_space<vmem>>, %arg2: memref<2x8x32xf32, #tpu.memory_space<vmem>>, %arg3: memref<32x16xf32, #tpu.memory_space<vmem>>, %arg4: memref<1x16xf32, #tpu.memory_space<vmem>>, %arg5: memref<2x4x4xf32, #tpu.memory_space<vmem>>, %arg6: memref<2x4x256xf32, #tpu.memory_space<vmem>>) attributes {dimension_semantics = [#tpu.dimension_semantics<arbitrary>], iteration_bounds = array<i64: 1>, scalar_prefetch = 0 : i64, scratch_operands = 0 : i64, tpu.core_type = #tpu.core_type<tc>, window_params = [{pipeline_mode = #tpu.pipeline_mode<synchronous>, transform_indices = @transform_0, window_bounds = array<i64: 2, 4, 256>}, {pipeline_mode = #tpu.pipeline_mode<synchronous>, transform_indices = @transform_1, window_bounds = array<i64: 2, 8, 32>}, {pipeline_mode = #tpu.pipeline_mode<synchronous>, transform_indices = @transform_2, window_bounds = array<i64: 32, 16>}, {pipeline_mode = #tpu.pipeline_mode<synchronous>, transform_indices = @transform_3, window_bounds = array<i64: 1, 16>}, {pipeline_mode = #tpu.pipeline_mode<synchronous>, transform_indices = @transform_4, window_bounds = array<i64: 2, 4, 4>}, {pipeline_mode = #tpu.pipeline_mode<synchronous>, transform_indices = @transform_5, window_bounds = array<i64: 2, 4, 256>}]} {
    %c0 = arith.constant 0 : index
    %c0_0 = arith.constant 0 : index
    %c0_1 = arith.constant 0 : index
    %0 = vector.load %arg2[%c0, %c0_0, %c0_1] : memref<2x8x32xf32, #tpu.memory_space<vmem>>, vector<2x8x32xf32>
    %1 = vector.shape_cast %0 : vector<2x8x32xf32> to vector<16x32xf32>
    %c0_2 = arith.constant 0 : index
    %c0_3 = arith.constant 0 : index
    %2 = vector.load %arg3[%c0_2, %c0_3] : memref<32x16xf32, #tpu.memory_space<vmem>>, vector<32x16xf32>
    %cst = arith.constant dense<0.000000e+00> : vector<16x16xf32>
    %3 = tpu.matmul %1, %2, %cst {dimension_numbers = #tpu.dot_dimension_numbers<[1], [0], [0], [1], [0, 0, 1, 1], [], []>} : vector<16x32xf32>, vector<32x16xf32>, vector<16x16xf32> -> vector<16x16xf32>
    %c0_4 = arith.constant 0 : index
    %c0_5 = arith.constant 0 : index
    %4 = vector.load %arg4[%c0_4, %c0_5] : memref<1x16xf32, #tpu.memory_space<vmem>>, vector<1x16xf32>
    %5 = vector.broadcast %4 : vector<1x16xf32> to vector<16x16xf32>
    %6 = arith.addf %3, %5 : vector<16x16xf32>
    %7 = vector.extract_strided_slice %6 {offsets = [0, 0], sizes = [8, 16], strides = [1, 1]} : vector<16x16xf32> to vector<8x16xf32>
    %c0_6 = arith.constant 0 : index
    %c0_7 = arith.constant 0 : index
    %c0_8 = arith.constant 0 : index
    %8 = vector.load %arg1[%c0_6, %c0_7, %c0_8] : memref<2x4x256xf32, #tpu.memory_space<vmem>>, vector<1x4x256xf32>
    %9 = vector.shape_cast %8 : vector<1x4x256xf32> to vector<4x256xf32>
    %10 = vector.extract_strided_slice %7 {offsets = [0, 0], sizes = [8, 4], strides = [1, 1]} : vector<8x16xf32> to vector<8x4xf32>
    %11 = vector.extract_strided_slice %7 {offsets = [0, 4], sizes = [8, 4], strides = [1, 1]} : vector<8x16xf32> to vector<8x4xf32>
    %12 = tpu.concatenate %10, %11 in 0 : vector<8x4xf32>, vector<8x4xf32> -> vector<16x4xf32>
    %cst_9 = arith.constant dense<0.000000e+00> : vector<16x256xf32>
    %13 = tpu.matmul %12, %9, %cst_9 {dimension_numbers = #tpu.dot_dimension_numbers<[1], [0], [0], [1], [0, 0, 1, 1], [], []>} : vector<16x4xf32>, vector<4x256xf32>, vector<16x256xf32> -> vector<16x256xf32>
    %14 = vector.extract_strided_slice %13 {offsets = [0, 0], sizes = [4, 256], strides = [1, 1]} : vector<16x256xf32> to vector<4x256xf32>
    %15 = vector.extract_strided_slice %13 {offsets = [8, 0], sizes = [4, 256], strides = [1, 1]} : vector<16x256xf32> to vector<4x256xf32>
    %16 = tpu.concatenate %14, %15 in 0 : vector<4x256xf32>, vector<4x256xf32> -> vector<8x256xf32>
    %cst_10 = arith.constant dense<0xFF800000> : vector<256xf32>
    %17 = vector.multi_reduction <maximumf>, %16, %cst_10 [0] : vector<8x256xf32> to vector<256xf32>
    %18 = vector.shape_cast %17 : vector<256xf32> to vector<1x256xf32>
    %19 = vector.broadcast %18 : vector<1x256xf32> to vector<8x256xf32>
    %20 = arith.subf %16, %19 : vector<8x256xf32>
    %21 = math.exp %20 : vector<8x256xf32>
    %cst_11 = arith.constant dense<0.000000e+00> : vector<256xf32>
    %22 = vector.multi_reduction <add>, %21, %cst_11 [0] : vector<8x256xf32> to vector<256xf32>
    %23 = vector.shape_cast %22 : vector<256xf32> to vector<1x256xf32>
    %24 = tpu.reciprocal %23 : vector<1x256xf32> -> vector<1x256xf32>
    %25 = vector.broadcast %24 : vector<1x256xf32> to vector<8x256xf32>
    %26 = arith.mulf %21, %25 : vector<8x256xf32>
    %27 = vector.extract_strided_slice %7 {offsets = [0, 8], sizes = [4, 4], strides = [1, 1]} : vector<8x16xf32> to vector<4x4xf32>
    %c0_12 = arith.constant 0 : index
    %c0_13 = arith.constant 0 : index
    %c0_14 = arith.constant 0 : index
    %28 = vector.load %arg5[%c0_12, %c0_13, %c0_14] : memref<2x4x4xf32, #tpu.memory_space<vmem>>, vector<1x4x4xf32>
    %29 = vector.shape_cast %28 : vector<1x4x4xf32> to vector<4x4xf32>
    %cst_15 = arith.constant dense<0.000000e+00> : vector<4x4xf32>
    %30 = tpu.matmul %27, %29, %cst_15 {dimension_numbers = #tpu.dot_dimension_numbers<[1], [0], [0], [1], [0, 0, 1, 1], [], []>} : vector<4x4xf32>, vector<4x4xf32>, vector<4x4xf32> -> vector<4x4xf32>
    %31 = vector.extract_strided_slice %7 {offsets = [0, 12], sizes = [4, 4], strides = [1, 1]} : vector<8x16xf32> to vector<4x4xf32>
    %c0_16 = arith.constant 0 : index
    %c0_17 = arith.constant 0 : index
    %c0_18 = arith.constant 0 : index
    %32 = vector.load %arg5[%c0_16, %c0_17, %c0_18] : memref<2x4x4xf32, #tpu.memory_space<vmem>>, vector<1x4x4xf32>
    %33 = vector.shape_cast %32 : vector<1x4x4xf32> to vector<4x4xf32>
    %cst_19 = arith.constant dense<0.000000e+00> : vector<4x4xf32>
    %34 = tpu.matmul %31, %33, %cst_19 {dimension_numbers = #tpu.dot_dimension_numbers<[1], [0], [0], [1], [0, 0, 1, 1], [], []>} : vector<4x4xf32>, vector<4x4xf32>, vector<4x4xf32> -> vector<4x4xf32>
    %35 = tpu.concatenate %30, %34 in 0 : vector<4x4xf32>, vector<4x4xf32> -> vector<8x4xf32>
    %36 = vector.extract_strided_slice %13 {offsets = [4, 0], sizes = [4, 256], strides = [1, 1]} : vector<16x256xf32> to vector<4x256xf32>
    %37 = vector.extract_strided_slice %13 {offsets = [12, 0], sizes = [4, 256], strides = [1, 1]} : vector<16x256xf32> to vector<4x256xf32>
    %38 = tpu.concatenate %36, %37 in 0 : vector<4x256xf32>, vector<4x256xf32> -> vector<8x256xf32>
    %cst_20 = arith.constant dense<0xFF800000> : vector<256xf32>
    %39 = vector.multi_reduction <maximumf>, %38, %cst_20 [0] : vector<8x256xf32> to vector<256xf32>
    %40 = vector.shape_cast %39 : vector<256xf32> to vector<1x256xf32>
    %41 = vector.broadcast %40 : vector<1x256xf32> to vector<8x256xf32>
    %42 = arith.subf %38, %41 : vector<8x256xf32>
    %43 = math.exp %42 : vector<8x256xf32>
    %cst_21 = arith.constant dense<0.000000e+00> : vector<256xf32>
    %44 = vector.multi_reduction <add>, %43, %cst_21 [0] : vector<8x256xf32> to vector<256xf32>
    %45 = vector.shape_cast %44 : vector<256xf32> to vector<1x256xf32>
    %46 = tpu.reciprocal %45 : vector<1x256xf32> -> vector<1x256xf32>
    %47 = vector.broadcast %46 : vector<1x256xf32> to vector<8x256xf32>
    %48 = arith.mulf %43, %47 : vector<8x256xf32>
    %49 = vector.extract_strided_slice %7 {offsets = [4, 8], sizes = [4, 4], strides = [1, 1]} : vector<8x16xf32> to vector<4x4xf32>
    %c1 = arith.constant 1 : index
    %c0_22 = arith.constant 0 : index
    %c0_23 = arith.constant 0 : index
    %50 = vector.load %arg5[%c1, %c0_22, %c0_23] : memref<2x4x4xf32, #tpu.memory_space<vmem>>, vector<1x4x4xf32>
    %51 = vector.shape_cast %50 : vector<1x4x4xf32> to vector<4x4xf32>
    %cst_24 = arith.constant dense<0.000000e+00> : vector<4x4xf32>
    %52 = tpu.matmul %49, %51, %cst_24 {dimension_numbers = #tpu.dot_dimension_numbers<[1], [0], [0], [1], [0, 0, 1, 1], [], []>} : vector<4x4xf32>, vector<4x4xf32>, vector<4x4xf32> -> vector<4x4xf32>
    %53 = vector.extract_strided_slice %7 {offsets = [4, 12], sizes = [4, 4], strides = [1, 1]} : vector<8x16xf32> to vector<4x4xf32>
    %c1_25 = arith.constant 1 : index
    %c0_26 = arith.constant 0 : index
    %c0_27 = arith.constant 0 : index
    %54 = vector.load %arg5[%c1_25, %c0_26, %c0_27] : memref<2x4x4xf32, #tpu.memory_space<vmem>>, vector<1x4x4xf32>
    %55 = vector.shape_cast %54 : vector<1x4x4xf32> to vector<4x4xf32>
    %cst_28 = arith.constant dense<0.000000e+00> : vector<4x4xf32>
    %56 = tpu.matmul %53, %55, %cst_28 {dimension_numbers = #tpu.dot_dimension_numbers<[1], [0], [0], [1], [0, 0, 1, 1], [], []>} : vector<4x4xf32>, vector<4x4xf32>, vector<4x4xf32> -> vector<4x4xf32>
    %57 = tpu.concatenate %52, %56 in 0 : vector<4x4xf32>, vector<4x4xf32> -> vector<8x4xf32>
    %58 = tpu.concatenate %26, %48 in 0 : vector<8x256xf32>, vector<8x256xf32> -> vector<16x256xf32>
    %59 = tpu.concatenate %35, %57 in 0 : vector<8x4xf32>, vector<8x4xf32> -> vector<16x4xf32>
    %cst_29 = arith.constant dense<0.000000e+00> : vector<4x256xf32>
    %60 = tpu.matmul %59, %58, %cst_29 {dimension_numbers = #tpu.dot_dimension_numbers<[0], [0], [1], [1], [0, 1, 1, 1], [], []>} : vector<16x4xf32>, vector<16x256xf32>, vector<4x256xf32> -> vector<4x256xf32>
    %c0_30 = arith.constant 0 : index
    %c0_31 = arith.constant 0 : index
    %c0_32 = arith.constant 0 : index
    %61 = vector.load %arg6[%c0_30, %c0_31, %c0_32] : memref<2x4x256xf32, #tpu.memory_space<vmem>>, vector<1x4x256xf32>
    %62 = vector.shape_cast %61 : vector<1x4x256xf32> to vector<4x256xf32>
    %63 = vector.shape_cast %60 : vector<4x256xf32> to vector<1x4x256xf32>
    tpu.vector_store %arg6[%c0_30, %c0_31, %c0_32], %63 {strides = array<i32>} : memref<2x4x256xf32, #tpu.memory_space<vmem>>, vector<1x4x256xf32>,
    %64 = vector.extract_strided_slice %6 {offsets = [8, 0], sizes = [8, 16], strides = [1, 1]} : vector<16x16xf32> to vector<8x16xf32>
    %c1_33 = arith.constant 1 : index
    %c0_34 = arith.constant 0 : index
    %c0_35 = arith.constant 0 : index
    %65 = vector.load %arg1[%c1_33, %c0_34, %c0_35] : memref<2x4x256xf32, #tpu.memory_space<vmem>>, vector<1x4x256xf32>
    %66 = vector.shape_cast %65 : vector<1x4x256xf32> to vector<4x256xf32>
    %67 = vector.extract_strided_slice %64 {offsets = [0, 0], sizes = [8, 4], strides = [1, 1]} : vector<8x16xf32> to vector<8x4xf32>
    %68 = vector.extract_strided_slice %64 {offsets = [0, 4], sizes = [8, 4], strides = [1, 1]} : vector<8x16xf32> to vector<8x4xf32>
    %69 = tpu.concatenate %67, %68 in 0 : vector<8x4xf32>, vector<8x4xf32> -> vector<16x4xf32>
    %cst_36 = arith.constant dense<0.000000e+00> : vector<16x256xf32>
    %70 = tpu.matmul %69, %66, %cst_36 {dimension_numbers = #tpu.dot_dimension_numbers<[1], [0], [0], [1], [0, 0, 1, 1], [], []>} : vector<16x4xf32>, vector<4x256xf32>, vector<16x256xf32> -> vector<16x256xf32>
    %71 = vector.extract_strided_slice %70 {offsets = [0, 0], sizes = [4, 256], strides = [1, 1]} : vector<16x256xf32> to vector<4x256xf32>
    %72 = vector.extract_strided_slice %70 {offsets = [8, 0], sizes = [4, 256], strides = [1, 1]} : vector<16x256xf32> to vector<4x256xf32>
    %73 = tpu.concatenate %71, %72 in 0 : vector<4x256xf32>, vector<4x256xf32> -> vector<8x256xf32>
    %cst_37 = arith.constant dense<0xFF800000> : vector<256xf32>
    %74 = vector.multi_reduction <maximumf>, %73, %cst_37 [0] : vector<8x256xf32> to vector<256xf32>
    %75 = vector.shape_cast %74 : vector<256xf32> to vector<1x256xf32>
    %76 = vector.broadcast %75 : vector<1x256xf32> to vector<8x256xf32>
    %77 = arith.subf %73, %76 : vector<8x256xf32>
    %78 = math.exp %77 : vector<8x256xf32>
    %cst_38 = arith.constant dense<0.000000e+00> : vector<256xf32>
    %79 = vector.multi_reduction <add>, %78, %cst_38 [0] : vector<8x256xf32> to vector<256xf32>
    %80 = vector.shape_cast %79 : vector<256xf32> to vector<1x256xf32>
    %81 = tpu.reciprocal %80 : vector<1x256xf32> -> vector<1x256xf32>
    %82 = vector.broadcast %81 : vector<1x256xf32> to vector<8x256xf32>
    %83 = arith.mulf %78, %82 : vector<8x256xf32>
    %84 = vector.extract_strided_slice %64 {offsets = [0, 8], sizes = [4, 4], strides = [1, 1]} : vector<8x16xf32> to vector<4x4xf32>
    %c0_39 = arith.constant 0 : index
    %c0_40 = arith.constant 0 : index
    %c0_41 = arith.constant 0 : index
    %85 = vector.load %arg5[%c0_39, %c0_40, %c0_41] : memref<2x4x4xf32, #tpu.memory_space<vmem>>, vector<1x4x4xf32>
    %86 = vector.shape_cast %85 : vector<1x4x4xf32> to vector<4x4xf32>
    %cst_42 = arith.constant dense<0.000000e+00> : vector<4x4xf32>
    %87 = tpu.matmul %84, %86, %cst_42 {dimension_numbers = #tpu.dot_dimension_numbers<[1], [0], [0], [1], [0, 0, 1, 1], [], []>} : vector<4x4xf32>, vector<4x4xf32>, vector<4x4xf32> -> vector<4x4xf32>
    %88 = vector.extract_strided_slice %64 {offsets = [0, 12], sizes = [4, 4], strides = [1, 1]} : vector<8x16xf32> to vector<4x4xf32>
    %c0_43 = arith.constant 0 : index
    %c0_44 = arith.constant 0 : index
    %c0_45 = arith.constant 0 : index
    %89 = vector.load %arg5[%c0_43, %c0_44, %c0_45] : memref<2x4x4xf32, #tpu.memory_space<vmem>>, vector<1x4x4xf32>
    %90 = vector.shape_cast %89 : vector<1x4x4xf32> to vector<4x4xf32>
    %cst_46 = arith.constant dense<0.000000e+00> : vector<4x4xf32>
    %91 = tpu.matmul %88, %90, %cst_46 {dimension_numbers = #tpu.dot_dimension_numbers<[1], [0], [0], [1], [0, 0, 1, 1], [], []>} : vector<4x4xf32>, vector<4x4xf32>, vector<4x4xf32> -> vector<4x4xf32>
    %92 = tpu.concatenate %87, %91 in 0 : vector<4x4xf32>, vector<4x4xf32> -> vector<8x4xf32>
    %93 = vector.extract_strided_slice %70 {offsets = [4, 0], sizes = [4, 256], strides = [1, 1]} : vector<16x256xf32> to vector<4x256xf32>
    %94 = vector.extract_strided_slice %70 {offsets = [12, 0], sizes = [4, 256], strides = [1, 1]} : vector<16x256xf32> to vector<4x256xf32>
    %95 = tpu.concatenate %93, %94 in 0 : vector<4x256xf32>, vector<4x256xf32> -> vector<8x256xf32>
    %cst_47 = arith.constant dense<0xFF800000> : vector<256xf32>
    %96 = vector.multi_reduction <maximumf>, %95, %cst_47 [0] : vector<8x256xf32> to vector<256xf32>
    %97 = vector.shape_cast %96 : vector<256xf32> to vector<1x256xf32>
    %98 = vector.broadcast %97 : vector<1x256xf32> to vector<8x256xf32>
    %99 = arith.subf %95, %98 : vector<8x256xf32>
    %100 = math.exp %99 : vector<8x256xf32>
    %cst_48 = arith.constant dense<0.000000e+00> : vector<256xf32>
    %101 = vector.multi_reduction <add>, %100, %cst_48 [0] : vector<8x256xf32> to vector<256xf32>
    %102 = vector.shape_cast %101 : vector<256xf32> to vector<1x256xf32>
    %103 = tpu.reciprocal %102 : vector<1x256xf32> -> vector<1x256xf32>
    %104 = vector.broadcast %103 : vector<1x256xf32> to vector<8x256xf32>
    %105 = arith.mulf %100, %104 : vector<8x256xf32>
    %106 = vector.extract_strided_slice %64 {offsets = [4, 8], sizes = [4, 4], strides = [1, 1]} : vector<8x16xf32> to vector<4x4xf32>
    %c1_49 = arith.constant 1 : index
    %c0_50 = arith.constant 0 : index
    %c0_51 = arith.constant 0 : index
    %107 = vector.load %arg5[%c1_49, %c0_50, %c0_51] : memref<2x4x4xf32, #tpu.memory_space<vmem>>, vector<1x4x4xf32>
    %108 = vector.shape_cast %107 : vector<1x4x4xf32> to vector<4x4xf32>
    %cst_52 = arith.constant dense<0.000000e+00> : vector<4x4xf32>
    %109 = tpu.matmul %106, %108, %cst_52 {dimension_numbers = #tpu.dot_dimension_numbers<[1], [0], [0], [1], [0, 0, 1, 1], [], []>} : vector<4x4xf32>, vector<4x4xf32>, vector<4x4xf32> -> vector<4x4xf32>
    %110 = vector.extract_strided_slice %64 {offsets = [4, 12], sizes = [4, 4], strides = [1, 1]} : vector<8x16xf32> to vector<4x4xf32>
    %c1_53 = arith.constant 1 : index
    %c0_54 = arith.constant 0 : index
    %c0_55 = arith.constant 0 : index
    %111 = vector.load %arg5[%c1_53, %c0_54, %c0_55] : memref<2x4x4xf32, #tpu.memory_space<vmem>>, vector<1x4x4xf32>
    %112 = vector.shape_cast %111 : vector<1x4x4xf32> to vector<4x4xf32>
    %cst_56 = arith.constant dense<0.000000e+00> : vector<4x4xf32>
    %113 = tpu.matmul %110, %112, %cst_56 {dimension_numbers = #tpu.dot_dimension_numbers<[1], [0], [0], [1], [0, 0, 1, 1], [], []>} : vector<4x4xf32>, vector<4x4xf32>, vector<4x4xf32> -> vector<4x4xf32>
    %114 = tpu.concatenate %109, %113 in 0 : vector<4x4xf32>, vector<4x4xf32> -> vector<8x4xf32>
    %115 = tpu.concatenate %83, %105 in 0 : vector<8x256xf32>, vector<8x256xf32> -> vector<16x256xf32>
    %116 = tpu.concatenate %92, %114 in 0 : vector<8x4xf32>, vector<8x4xf32> -> vector<16x4xf32>
    %cst_57 = arith.constant dense<0.000000e+00> : vector<4x256xf32>
    %117 = tpu.matmul %116, %115, %cst_57 {dimension_numbers = #tpu.dot_dimension_numbers<[0], [0], [1], [1], [0, 1, 1, 1], [], []>} : vector<16x4xf32>, vector<16x256xf32>, vector<4x256xf32> -> vector<4x256xf32>
    %c1_58 = arith.constant 1 : index
    %c0_59 = arith.constant 0 : index
    %c0_60 = arith.constant 0 : index
    %118 = vector.load %arg6[%c1_58, %c0_59, %c0_60] : memref<2x4x256xf32, #tpu.memory_space<vmem>>, vector<1x4x256xf32>
    %119 = vector.shape_cast %118 : vector<1x4x256xf32> to vector<4x256xf32>
    %120 = vector.shape_cast %117 : vector<4x256xf32> to vector<1x4x256xf32>
    tpu.vector_store %arg6[%c1_58, %c0_59, %c0_60], %120 {strides = array<i32>} : memref<2x4x256xf32, #tpu.memory_space<vmem>>, vector<1x4x256xf32>,
    return
  }
  func.func @transform_0(%arg0: i32) -> (i32, i32, i32) {
    %c0_i32 = arith.constant 0 : i32
    %c0_i32_0 = arith.constant 0 : i32
    %c0_i32_1 = arith.constant 0 : i32
    %c0_i32_2 = arith.constant 0 : i32
    return %c0_i32, %c0_i32_0, %c0_i32_1 : i32, i32, i32
  }
  func.func @transform_1(%arg0: i32) -> (i32, i32, i32) {
    %c0_i32 = arith.constant 0 : i32
    %c0_i32_0 = arith.constant 0 : i32
    %c0_i32_1 = arith.constant 0 : i32
    %c0_i32_2 = arith.constant 0 : i32
    return %c0_i32, %c0_i32_0, %c0_i32_1 : i32, i32, i32
  }
  func.func @transform_2(%arg0: i32) -> (i32, i32) {
    %c0_i32 = arith.constant 0 : i32
    %c0_i32_0 = arith.constant 0 : i32
    %c0_i32_1 = arith.constant 0 : i32
    return %c0_i32, %c0_i32_0 : i32, i32
  }
  func.func @transform_3(%arg0: i32) -> (i32, i32) {
    %c0_i32 = arith.constant 0 : i32
    %c0_i32_0 = arith.constant 0 : i32
    %c0_i32_1 = arith.constant 0 : i32
    return %c0_i32, %c0_i32_0 : i32, i32
  }
  func.func @transform_4(%arg0: i32) -> (i32, i32, i32) {
    %c0_i32 = arith.constant 0 : i32
    %c0_i32_0 = arith.constant 0 : i32
    %c0_i32_1 = arith.constant 0 : i32
    %c0_i32_2 = arith.constant 0 : i32
    return %c0_i32, %c0_i32_0, %c0_i32_1 : i32, i32, i32
  }
  func.func @transform_5(%arg0: i32) -> (i32, i32, i32) {
    %c0_i32 = arith.constant 0 : i32
    %c0_i32_0 = arith.constant 0 : i32
    %c0_i32_1 = arith.constant 0 : i32
    %c0_i32_2 = arith.constant 0 : i32
    return %c0_i32, %c0_i32_0, %c0_i32_1 : i32, i32, i32
  }
}

</mosaic_0001>

<llo_original>
// kernel: former2mobile_forward.1
$region0: #{former2mobile_forward.1}
  #allocation0 [shape = 'u32[]', space=smem, size = 0x4, offset = 0x4, fixed_abs, tag = 'smem constant byte address 0x4 - core index']
  #allocation1 [shape = 'u32[144,128]{1,0:T(1,128)}', space=vmem, size = 0x12000, scoped, tag = 'internal scratch']
  %s0 = inlined_call_operand.vmem [shape: f32[2,4,256], index: 0, kind: input, shape index: {}]
  %s1 = inlined_call_operand.vmem [shape: f32[2,8,32], index: 1, kind: input, shape index: {}]
  %s2 = inlined_call_operand.vmem [shape: f32[32,16], index: 2, kind: input, shape index: {}]
  %s3 = inlined_call_operand.vmem [shape: f32[1,16], index: 3, kind: input, shape index: {}]
  %s4 = inlined_call_operand.vmem [shape: f32[2,4,4], index: 4, kind: input, shape index: {}]
  %s5 = inlined_call_operand.vmem [shape: f32[2,4,256], index: 5, kind: output, shape index: {}]
  %s6 = sld [smem:[#allocation0]]
  $region30: #{former2mobile_forward.1} parent=0
    _
  %s8 = ssub.s32 1, %s6
  %s9 = scalar_select 0, %s8, %s6
  // Predicated region
  $region2: #{former2mobile_forward.1} parent=0 // pred_check
    _
  $region3: #{former2mobile_forward.1} parent=0 // pred_check_branch
    %11 = sbr.rel (0) target = $region5
  $region4: #{former2mobile_forward.1} parent=0 // pred_region
    _
  $region5: #{former2mobile_forward.1} parent=0 // pred_fallthru
    _
  // Predicated region
  $region6: #{former2mobile_forward.1} parent=0 // pred_check
    _
  $region7: #{former2mobile_forward.1} parent=0 // pred_check_branch
    %13 = sbr.rel (0) target = $region9
  $region8: #{former2mobile_forward.1} parent=0 // pred_region
    _
  $region9: #{former2mobile_forward.1} parent=0 // pred_fallthru
    _
  // Predicated region
  $region10: #{former2mobile_forward.1} parent=0 // pred_check
    _
  $region11: #{former2mobile_forward.1} parent=0 // pred_check_branch
    %15 = sbr.rel (0) target = $region13
  $region12: #{former2mobile_forward.1} parent=0 // pred_region
    _
  $region13: #{former2mobile_forward.1} parent=0 // pred_fallthru
    _
  // Predicated region
  $region14: #{former2mobile_forward.1} parent=0 // pred_check
    _
  $region15: #{former2mobile_forward.1} parent=0 // pred_check_branch
    %17 = sbr.rel (0) target = $region17
  $region16: #{former2mobile_forward.1} parent=0 // pred_region
    _
  $region17: #{former2mobile_forward.1} parent=0 // pred_fallthru
    _
  // Predicated region
  $region18: #{former2mobile_forward.1} parent=0 // pred_check
    _
  $region19: #{former2mobile_forward.1} parent=0 // pred_check_branch
    %19 = sbr.rel (0) target = $region21
  $region20: #{former2mobile_forward.1} parent=0 // pred_region
    _
  $region21: #{former2mobile_forward.1} parent=0 // pred_fallthru
    _
  %v20 = vld [vmem:[%s1] sm:$0xff]
  %v21 = vld [vmem:[%s1 + $0x8] sm:$0xff]
  %v22 = vld [vmem:[%s2] sm:$0xff]
  %v23 = vld [vmem:[%s2 + $0x8] sm:$0xff]
  %v24 = vld [vmem:[%s2 + $0x10] sm:$0xff]
  %v25 = vld [vmem:[%s2 + $0x18] sm:$0xff]
  %v26 = vld [vmem:[%s3] sm:$0x1]
  %v28 = vlaneseq
  %v29 = vshrl.u32 %v28, 7
  %v30 = vsub.s32 0, %v29
  %v31 = vrot.slane %v26, %v30
  %vm33 = vcmask 261120
  %v35 = vsel %vm33, %v20, 0
  %v38 = vsel %vm33, %v21, 0
  %40 = vmatprep.subr.mxu0 0.0
  %41 = vmatpush1.msra.mxu0 %v22
  %42 = vmatprep.subr.mxu0 0.0
  %43 = vmatpush1.msra.mxu0 %v23
  %44 = vmatprep.subr.mxu0 0.0
  %45 = vmatpush1.msra.mxu0 %v24
  %46 = vmatprep.subr.mxu0 0.0
  %47 = vmatpush1.msra.mxu0 %v25
  %48 = vmatprep.subr.mxu0 0.0
  %49 = vmatpush1.msra.mxu0 0.0
  %50 = vmatprep.subr.mxu0 0.0
  %51 = vmatpush1.msra.mxu0 0.0
  %52 = vmatprep.subr.mxu0 0.0
  %53 = vmatpush1.msra.mxu0 0.0
  %54 = vmatprep.subr.mxu0 0.0
  %55 = vmatpush1.msra.mxu0 0.0
  %56 = vmatprep.subr.mxu0 0.0
  %57 = vmatpush1.msra.mxu0 0.0
  %58 = vmatprep.subr.mxu0 0.0
  %59 = vmatpush1.msra.mxu0 0.0
  %60 = vmatprep.subr.mxu0 0.0
  %61 = vmatpush1.msra.mxu0 0.0
  %62 = vmatprep.subr.mxu0 0.0
  %63 = vmatpush1.msra.mxu0 0.0
  %64 = vmatprep.subr.mxu0 0.0
  %65 = vmatpush1.msra.mxu0 0.0
  %66 = vmatprep.subr.mxu0 0.0
  %67 = vmatpush1.msra.mxu0 0.0
  %68 = vmatprep.subr.mxu0 0.0
  %69 = vmatpush1.msra.mxu0 0.0
  %70 = vmatprep.subr.mxu0 0.0
  %71 = vmatpush1.msra.mxu0 0.0
  %72 = vmatprep.subr.mxu0 0.0
  %73 = vmatpush1.msra.mxu0 0.0
  %74 = vmatprep.subr.mxu0 0.0
  %75 = vmatpush1.msra.mxu0 0.0
  %76 = vmatprep.subr.mxu0 0.0
  %77 = vmatpush1.msra.mxu0 0.0
  %78 = vmatprep.subr.mxu0 0.0
  %79 = vmatpush1.msra.mxu0 0.0
  %80 = vmatprep.subr.mxu0 0.0
  %81 = vmatpush1.msra.mxu0 0.0
  %82 = vmatprep.subr.mxu0 0.0
  %83 = vmatpush1.msra.mxu0 0.0
  %84 = vmatprep.subr.mxu0 0.0
  %85 = vmatpush1.msra.mxu0 0.0
  %86 = vmatprep.subr.mxu0 0.0
  %87 = vmatpush1.msra.mxu0 0.0
  %88 = vmatprep.subr.mxu0 0.0
  %89 = vmatpush1.msra.mxu0 0.0
  %90 = vmatprep.subr.mxu0 0.0
  %91 = vmatpush1.msra.mxu0 0.0
  %92 = vmatprep.subr.mxu0 0.0
  %93 = vmatpush1.msra.mxu0 0.0
  %94 = vmatprep.subr.mxu0 0.0
  %95 = vmatpush1.msra.mxu0 0.0
  %96 = vmatprep.subr.mxu0 0.0
  %97 = vmatpush1.msra.mxu0 0.0
  %98 = vmatprep.subr.mxu0 0.0
  %99 = vmatpush1.msra.mxu0 0.0
  %100 = vmatprep.subr.mxu0 0.0
  %101 = vmatpush1.msra.mxu0 0.0
  %102 = vmatprep.subr.mxu0 0.0
  %103 = vmatpush1.msra.mxu0 0.0
  %104 = vmatprep.mubr.f32.mxu0 0.0
  %105 = vmatmul.mubr.f32.gmra.mrb[0].mxu0 %v35
  %v106 = vpop.f32.mrb[0].mxu0
  %v107 = vadd.f32 %v31, %v106
  %v108 = vpop.f32.mrb[0].mxu0
  %109 = vmatprep.mubr.f32.mxu0 0.0
  %110 = vmatmul.mubr.f32.gmra.mrb[0].mxu0 %v38
  %v111 = vpop.f32.mrb[0].mxu0
  %v112 = vadd.f32 %v31, %v111
  %v113 = vpop.f32.mrb[0].mxu0
  %114 = vdwg.mxu0
  %v115 = vld [vmem:[%s0] sm:$0xff]
  %117 = vrot.lane.b32.xlu0 %v107, 124
  %v118 = vpop.permute.xlu0 %117
  %v120 = vcombine.high %v115, %v115
  %vm121 = vcmask 31744
  %v122 = vsel %vm121, %v107, 0
  %v124 = vsel %vm121, %v118, 0
  %vm126 = vcmask 1043456
  %v127 = vsel %vm126, %v115, 0
  %v129 = vsel %vm126, %v120, 0
  %131 = vmatprep.subr.mxu0 %v129
  %132 = vmatpush1.msra.mxu0 %v127
  %133 = vmatprep.subr.mxu0 0.0
  %134 = vmatpush1.msra.mxu0 0.0
  %135 = vmatprep.subr.mxu0 0.0
  %136 = vmatpush1.msra.mxu0 0.0
  %137 = vmatprep.subr.mxu0 0.0
  %138 = vmatpush1.msra.mxu0 0.0
  %139 = vmatprep.subr.mxu0 0.0
  %140 = vmatpush1.msra.mxu0 0.0
  %141 = vmatprep.subr.mxu0 0.0
  %142 = vmatpush1.msra.mxu0 0.0
  %143 = vmatprep.subr.mxu0 0.0
  %144 = vmatpush1.msra.mxu0 0.0
  %145 = vmatprep.subr.mxu0 0.0
  %146 = vmatpush1.msra.mxu0 0.0
  %147 = vmatprep.subr.mxu0 0.0
  %148 = vmatpush1.msra.mxu0 0.0
  %149 = vmatprep.subr.mxu0 0.0
  %150 = vmatpush1.msra.mxu0 0.0
  %151 = vmatprep.subr.mxu0 0.0
  %152 = vmatpush1.msra.mxu0 0.0
  %153 = vmatprep.subr.mxu0 0.0
  %154 = vmatpush1.msra.mxu0 0.0
  %155 = vmatprep.subr.mxu0 0.0
  %156 = vmatpush1.msra.mxu0 0.0
  %157 = vmatprep.subr.mxu0 0.0
  %158 = vmatpush1.msra.mxu0 0.0
  %159 = vmatprep.subr.mxu0 0.0
  %160 = vmatpush1.msra.mxu0 0.0
  %161 = vmatprep.subr.mxu0 0.0
  %162 = vmatpush1.msra.mxu0 0.0
  %163 = vmatprep.subr.mxu0 0.0
  %164 = vmatpush1.msra.mxu0 0.0
  %165 = vmatprep.subr.mxu0 0.0
  %166 = vmatpush1.msra.mxu0 0.0
  %167 = vmatprep.subr.mxu0 0.0
  %168 = vmatpush1.msra.mxu0 0.0
  %169 = vmatprep.subr.mxu0 0.0
  %170 = vmatpush1.msra.mxu0 0.0
  %171 = vmatprep.subr.mxu0 0.0
  %172 = vmatpush1.msra.mxu0 0.0
  %173 = vmatprep.subr.mxu0 0.0
  %174 = vmatpush1.msra.mxu0 0.0
  %175 = vmatprep.subr.mxu0 0.0
  %176 = vmatpush1.msra.mxu0 0.0
  %177 = vmatprep.subr.mxu0 0.0
  %178 = vmatpush1.msra.mxu0 0.0
  %179 = vmatprep.subr.mxu0 0.0
  %180 = vmatpush1.msra.mxu0 0.0
  %181 = vmatprep.subr.mxu0 0.0
  %182 = vmatpush1.msra.mxu0 0.0
  %183 = vmatprep.subr.mxu0 0.0
  %184 = vmatpush1.msra.mxu0 0.0
  %185 = vmatprep.subr.mxu0 0.0
  %186 = vmatpush1.msra.mxu0 0.0
  %187 = vmatprep.subr.mxu0 0.0
  %188 = vmatpush1.msra.mxu0 0.0
  %189 = vmatprep.subr.mxu0 0.0
  %190 = vmatpush1.msra.mxu0 0.0
  %191 = vmatprep.subr.mxu0 0.0
  %192 = vmatpush1.msra.mxu0 0.0
  %193 = vmatprep.subr.mxu0 0.0
  %194 = vmatpush1.msra.mxu0 0.0
  %195 = vmatprep.mubr.f32.mxu0 0.0
  %196 = vmatmul.mubr.f32.gmra.mrb[0].mxu0 %v122
  %v197 = vpop.f32.mrb[0].mxu0
  %v198 = vadd.f32 0.0, %v197
  %v199 = vpop.f32.mrb[0].mxu0
  %v200 = vadd.f32 0.0, %v199
  %201 = vmatprep.mubr.f32.mxu0 0.0
  %202 = vmatmul.mubr.f32.gmra.mrb[0].mxu0 %v124
  %v203 = vpop.f32.mrb[0].mxu0
  %v204 = vadd.f32 0.0, %v203
  %v205 = vpop.f32.mrb[0].mxu0
  %v206 = vadd.f32 0.0, %v205
  %207 = vdwg.mxu0
  %v210 = vrot.slane %v204, 4
  %v211 = vrot.slane %v206, 4
  %v214 = vsel %vm126, %v198, %v210
  %v215 = vsel %vm126, %v200, %v211
  %v216 = vrot.slane %v214, 4
  %v217 = vmax.f32 %v214, %v216
  %v218 = vrot.slane %v217, 2
  %v219 = vmax.f32 %v217, %v218
  %v220 = vrot.slane %v219, 1
  %v221 = vmax.f32 %v219, %v220
  %v222 = vrot.slane %v215, 4
  %v223 = vmax.f32 %v215, %v222
  %v224 = vrot.slane %v223, 2
  %v225 = vmax.f32 %v223, %v224
  %v226 = vrot.slane %v225, 1
  %v227 = vmax.f32 %v225, %v226
  %v228 = vsub.f32 %v214, %v221
  %v229 = vsub.f32 %v215, %v227
  %v230 = vmul.f32 %v228, 1.442695
  %v231 = vpow.pop %v230
  %v232 = vmul.f32 %v229, 1.442695
  %v233 = vpow.pop %v232
  %v234 = vrot.slane %v231, 4
  %v235 = vadd.f32 %v231, %v234
  %v236 = vrot.slane %v235, 2
  %v237 = vadd.f32 %v235, %v236
  %v238 = vrot.slane %v237, 1
  %v239 = vadd.f32 %v237, %v238
  %v240 = vrot.slane %v233, 4
  %v241 = vadd.f32 %v233, %v240
  %v242 = vrot.slane %v241, 2
  %v243 = vadd.f32 %v241, %v242
  %v244 = vrot.slane %v243, 1
  %v245 = vadd.f32 %v243, %v244
  %v246 = vrcp.pop %v239
  %v247 = vrcp.pop %v245
  %v248 = vmul.f32 %v231, %v246
  %v249 = vmul.f32 %v233, %v247
  %v250 = vld [vmem:[%s4] sm:$0xf]
  %251 = vrot.lane.b32.xlu0 %v107, 120
  %v252 = vpop.permute.xlu0 %251
  %v253 = vsel %vm121, %v252, 0
  %v256 = vsel %vm126, %v250, 0
  %258 = vmatprep.subr.mxu0 0.0
  %259 = vmatpush1.msra.mxu0 %v256
  %260 = vmatprep.subr.mxu0 0.0
  %261 = vmatpush1.msra.mxu0 0.0
  %262 = vmatprep.subr.mxu0 0.0
  %263 = vmatpush1.msra.mxu0 0.0
  %264 = vmatprep.subr.mxu0 0.0
  %265 = vmatpush1.msra.mxu0 0.0
  %266 = vmatprep.subr.mxu0 0.0
  %267 = vmatpush1.msra.mxu0 0.0
  %268 = vmatprep.subr.mxu0 0.0
  %269 = vmatpush1.msra.mxu0 0.0
  %270 = vmatprep.subr.mxu0 0.0
  %271 = vmatpush1.msra.mxu0 0.0
  %272 = vmatprep.subr.mxu0 0.0
  %273 = vmatpush1.msra.mxu0 0.0
  %274 = vmatprep.subr.mxu0 0.0
  %275 = vmatpush1.msra.mxu0 0.0
  %276 = vmatprep.subr.mxu0 0.0
  %277 = vmatpush1.msra.mxu0 0.0
  %278 = vmatprep.subr.mxu0 0.0
  %279 = vmatpush1.msra.mxu0 0.0
  %280 = vmatprep.subr.mxu0 0.0
  %281 = vmatpush1.msra.mxu0 0.0
  %282 = vmatprep.subr.mxu0 0.0
  %283 = vmatpush1.msra.mxu0 0.0
  %284 = vmatprep.subr.mxu0 0.0
  %285 = vmatpush1.msra.mxu0 0.0
  %286 = vmatprep.subr.mxu0 0.0
  %287 = vmatpush1.msra.mxu0 0.0
  %288 = vmatprep.subr.mxu0 0.0
  %289 = vmatpush1.msra.mxu0 0.0
  %290 = vmatprep.subr.mxu0 0.0
  %291 = vmatpush1.msra.mxu0 0.0
  %292 = vmatprep.subr.mxu0 0.0
  %293 = vmatpush1.msra.mxu0 0.0
  %294 = vmatprep.subr.mxu0 0.0
  %295 = vmatpush1.msra.mxu0 0.0
  %296 = vmatprep.subr.mxu0 0.0
  %297 = vmatpush1.msra.mxu0 0.0
  %298 = vmatprep.subr.mxu0 0.0
  %299 = vmatpush1.msra.mxu0 0.0
  %300 = vmatprep.subr.mxu0 0.0
  %301 = vmatpush1.msra.mxu0 0.0
  %302 = vmatprep.subr.mxu0 0.0
  %303 = vmatpush1.msra.mxu0 0.0
  %304 = vmatprep.subr.mxu0 0.0
  %305 = vmatpush1.msra.mxu0 0.0
  %306 = vmatprep.subr.mxu0 0.0
  %307 = vmatpush1.msra.mxu0 0.0
  %308 = vmatprep.subr.mxu0 0.0
  %309 = vmatpush1.msra.mxu0 0.0
  %310 = vmatprep.subr.mxu0 0.0
  %311 = vmatpush1.msra.mxu0 0.0
  %312 = vmatprep.subr.mxu0 0.0
  %313 = vmatpush1.msra.mxu0 0.0
  %314 = vmatprep.subr.mxu0 0.0
  %315 = vmatpush1.msra.mxu0 0.0
  %316 = vmatprep.subr.mxu0 0.0
  %317 = vmatpush1.msra.mxu0 0.0
  %318 = vmatprep.subr.mxu0 0.0
  %319 = vmatpush1.msra.mxu0 0.0
  %320 = vmatprep.subr.mxu0 0.0
  %321 = vmatpush1.msra.mxu0 0.0
  %322 = vmatprep.mubr.f32.mxu0 0.0
  %323 = vmatmul.mubr.f32.gmra.mrb[0].mxu0 %v253
  %v324 = vpop.f32.mrb[0].mxu0
  %v325 = vadd.f32 0.0, %v324
  %v326 = vpop.f32.mrb[0].mxu0
  %327 = vdwg.mxu0
  %328 = vrot.lane.b32.xlu0 %v107, 116
  %v329 = vpop.permute.xlu0 %328
  %v330 = vsel %vm121, %v329, 0
  %332 = vmatprep.subr.mxu0 0.0
  %333 = vmatpush1.msra.mxu0 %v256
  %334 = vmatprep.subr.mxu0 0.0
  %335 = vmatpush1.msra.mxu0 0.0
  %336 = vmatprep.subr.mxu0 0.0
  %337 = vmatpush1.msra.mxu0 0.0
  %338 = vmatprep.subr.mxu0 0.0
  %339 = vmatpush1.msra.mxu0 0.0
  %340 = vmatprep.subr.mxu0 0.0
  %341 = vmatpush1.msra.mxu0 0.0
  %342 = vmatprep.subr.mxu0 0.0
  %343 = vmatpush1.msra.mxu0 0.0
  %344 = vmatprep.subr.mxu0 0.0
  %345 = vmatpush1.msra.mxu0 0.0
  %346 = vmatprep.subr.mxu0 0.0
  %347 = vmatpush1.msra.mxu0 0.0
  %348 = vmatprep.subr.mxu0 0.0
  %349 = vmatpush1.msra.mxu0 0.0
  %350 = vmatprep.subr.mxu0 0.0
  %351 = vmatpush1.msra.mxu0 0.0
  %352 = vmatprep.subr.mxu0 0.0
  %353 = vmatpush1.msra.mxu0 0.0
  %354 = vmatprep.subr.mxu0 0.0
  %355 = vmatpush1.msra.mxu0 0.0
  %356 = vmatprep.subr.mxu0 0.0
  %357 = vmatpush1.msra.mxu0 0.0
  %358 = vmatprep.subr.mxu0 0.0
  %359 = vmatpush1.msra.mxu0 0.0
  %360 = vmatprep.subr.mxu0 0.0
  %361 = vmatpush1.msra.mxu0 0.0
  %362 = vmatprep.subr.mxu0 0.0
  %363 = vmatpush1.msra.mxu0 0.0
  %364 = vmatprep.subr.mxu0 0.0
  %365 = vmatpush1.msra.mxu0 0.0
  %366 = vmatprep.subr.mxu0 0.0
  %367 = vmatpush1.msra.mxu0 0.0
  %368 = vmatprep.subr.mxu0 0.0
  %369 = vmatpush1.msra.mxu0 0.0
  %370 = vmatprep.subr.mxu0 0.0
  %371 = vmatpush1.msra.mxu0 0.0
  %372 = vmatprep.subr.mxu0 0.0
  %373 = vmatpush1.msra.mxu0 0.0
  %374 = vmatprep.subr.mxu0 0.0
  %375 = vmatpush1.msra.mxu0 0.0
  %376 = vmatprep.subr.mxu0 0.0
  %377 = vmatpush1.msra.mxu0 0.0
  %378 = vmatprep.subr.mxu0 0.0
  %379 = vmatpush1.msra.mxu0 0.0
  %380 = vmatprep.subr.mxu0 0.0
  %381 = vmatpush1.msra.mxu0 0.0
  %382 = vmatprep.subr.mxu0 0.0
  %383 = vmatpush1.msra.mxu0 0.0
  %384 = vmatprep.subr.mxu0 0.0
  %385 = vmatpush1.msra.mxu0 0.0
  %386 = vmatprep.subr.mxu0 0.0
  %387 = vmatpush1.msra.mxu0 0.0
  %388 = vmatprep.subr.mxu0 0.0
  %389 = vmatpush1.msra.mxu0 0.0
  %390 = vmatprep.subr.mxu0 0.0
  %391 = vmatpush1.msra.mxu0 0.0
  %392 = vmatprep.subr.mxu0 0.0
  %393 = vmatpush1.msra.mxu0 0.0
  %394 = vmatprep.subr.mxu0 0.0
  %395 = vmatpush1.msra.mxu0 0.0
  %396 = vmatprep.mubr.f32.mxu0 0.0
  %397 = vmatmul.mubr.f32.gmra.mrb[0].mxu0 %v330
  %v398 = vpop.f32.mrb[0].mxu0
  %v399 = vadd.f32 0.0, %v398
  %v400 = vpop.f32.mrb[0].mxu0
  %401 = vdwg.mxu0
  %v403 = vrot.slane %v399, 4
  %v405 = vsel %vm126, %v325, %v403
  %v408 = vrot.slane %v198, 4
  %v409 = vrot.slane %v200, 4
  %v412 = vsel %vm126, %v408, %v204
  %v413 = vsel %vm126, %v409, %v206
  %v414 = vrot.slane %v412, 4
  %v415 = vmax.f32 %v412, %v414
  %v416 = vrot.slane %v415, 2
  %v417 = vmax.f32 %v415, %v416
  %v418 = vrot.slane %v417, 1
  %v419 = vmax.f32 %v417, %v418
  %v420 = vrot.slane %v413, 4
  %v421 = vmax.f32 %v413, %v420
  %v422 = vrot.slane %v421, 2
  %v423 = vmax.f32 %v421, %v422
  %v424 = vrot.slane %v423, 1
  %v425 = vmax.f32 %v423, %v424
  %v426 = vsub.f32 %v412, %v419
  %v427 = vsub.f32 %v413, %v425
  %v428 = vmul.f32 %v426, 1.442695
  %v429 = vpow.pop %v428
  %v430 = vmul.f32 %v427, 1.442695
  %v431 = vpow.pop %v430
  %v432 = vrot.slane %v429, 4
  %v433 = vadd.f32 %v429, %v432
  %v434 = vrot.slane %v433, 2
  %v435 = vadd.f32 %v433, %v434
  %v436 = vrot.slane %v435, 1
  %v437 = vadd.f32 %v435, %v436
  %v438 = vrot.slane %v431, 4
  %v439 = vadd.f32 %v431, %v438
  %v440 = vrot.slane %v439, 2
  %v441 = vadd.f32 %v439, %v440
  %v442 = vrot.slane %v441, 1
  %v443 = vadd.f32 %v441, %v442
  %v444 = vrcp.pop %v437
  %v445 = vrcp.pop %v443
  %v446 = vmul.f32 %v429, %v444
  %v447 = vmul.f32 %v431, %v445
  %s448 = scalar_lea.vmem %s4, 4
  %v449 = vld [vmem:[%s448] sm:$0xf]
  %v450 = vrot.slane %v107, 4
  %451 = vrot.lane.b32.xlu0 %v450, 120
  %v452 = vpop.permute.xlu0 %451
  %v453 = vsel %vm121, %v452, 0
  %v456 = vsel %vm126, %v449, 0
  %458 = vmatprep.subr.mxu0 0.0
  %459 = vmatpush1.msra.mxu0 %v456
  %460 = vmatprep.subr.mxu0 0.0
  %461 = vmatpush1.msra.mxu0 0.0
  %462 = vmatprep.subr.mxu0 0.0
  %463 = vmatpush1.msra.mxu0 0.0
  %464 = vmatprep.subr.mxu0 0.0
  %465 = vmatpush1.msra.mxu0 0.0
  %466 = vmatprep.subr.mxu0 0.0
  %467 = vmatpush1.msra.mxu0 0.0
  %468 = vmatprep.subr.mxu0 0.0
  %469 = vmatpush1.msra.mxu0 0.0
  %470 = vmatprep.subr.mxu0 0.0
  %471 = vmatpush1.msra.mxu0 0.0
  %472 = vmatprep.subr.mxu0 0.0
  %473 = vmatpush1.msra.mxu0 0.0
  %474 = vmatprep.subr.mxu0 0.0
  %475 = vmatpush1.msra.mxu0 0.0
  %476 = vmatprep.subr.mxu0 0.0
  %477 = vmatpush1.msra.mxu0 0.0
  %478 = vmatprep.subr.mxu0 0.0
  %479 = vmatpush1.msra.mxu0 0.0
  %480 = vmatprep.subr.mxu0 0.0
  %481 = vmatpush1.msra.mxu0 0.0
  %482 = vmatprep.subr.mxu0 0.0
  %483 = vmatpush1.msra.mxu0 0.0
  %484 = vmatprep.subr.mxu0 0.0
  %485 = vmatpush1.msra.mxu0 0.0
  %486 = vmatprep.subr.mxu0 0.0
  %487 = vmatpush1.msra.mxu0 0.0
  %488 = vmatprep.subr.mxu0 0.0
  %489 = vmatpush1.msra.mxu0 0.0
  %490 = vmatprep.subr.mxu0 0.0
  %491 = vmatpush1.msra.mxu0 0.0
  %492 = vmatprep.subr.mxu0 0.0
  %493 = vmatpush1.msra.mxu0 0.0
  %494 = vmatprep.subr.mxu0 0.0
  %495 = vmatpush1.msra.mxu0 0.0
  %496 = vmatprep.subr.mxu0 0.0
  %497 = vmatpush1.msra.mxu0 0.0
  %498 = vmatprep.subr.mxu0 0.0
  %499 = vmatpush1.msra.mxu0 0.0
  %500 = vmatprep.subr.mxu0 0.0
  %501 = vmatpush1.msra.mxu0 0.0
  %502 = vmatprep.subr.mxu0 0.0
  %503 = vmatpush1.msra.mxu0 0.0
  %504 = vmatprep.subr.mxu0 0.0
  %505 = vmatpush1.msra.mxu0 0.0
  %506 = vmatprep.subr.mxu0 0.0
  %507 = vmatpush1.msra.mxu0 0.0
  %508 = vmatprep.subr.mxu0 0.0
  %509 = vmatpush1.msra.mxu0 0.0
  %510 = vmatprep.subr.mxu0 0.0
  %511 = vmatpush1.msra.mxu0 0.0
  %512 = vmatprep.subr.mxu0 0.0
  %513 = vmatpush1.msra.mxu0 0.0
  %514 = vmatprep.subr.mxu0 0.0
  %515 = vmatpush1.msra.mxu0 0.0
  %516 = vmatprep.subr.mxu0 0.0
  %517 = vmatpush1.msra.mxu0 0.0
  %518 = vmatprep.subr.mxu0 0.0
  %519 = vmatpush1.msra.mxu0 0.0
  %520 = vmatprep.subr.mxu0 0.0
  %521 = vmatpush1.msra.mxu0 0.0
  %522 = vmatprep.mubr.f32.mxu0 0.0
  %523 = vmatmul.mubr.f32.gmra.mrb[0].mxu0 %v453
  %v524 = vpop.f32.mrb[0].mxu0
  %v525 = vadd.f32 0.0, %v524
  %v526 = vpop.f32.mrb[0].mxu0
  %527 = vdwg.mxu0
  %528 = vrot.lane.b32.xlu0 %v450, 116
  %v529 = vpop.permute.xlu0 %528
  %v530 = vsel %vm121, %v529, 0
  %532 = vmatprep.subr.mxu0 0.0
  %533 = vmatpush1.msra.mxu0 %v456
  %534 = vmatprep.subr.mxu0 0.0
  %535 = vmatpush1.msra.mxu0 0.0
  %536 = vmatprep.subr.mxu0 0.0
  %537 = vmatpush1.msra.mxu0 0.0
  %538 = vmatprep.subr.mxu0 0.0
  %539 = vmatpush1.msra.mxu0 0.0
  %540 = vmatprep.subr.mxu0 0.0
  %541 = vmatpush1.msra.mxu0 0.0
  %542 = vmatprep.subr.mxu0 0.0
  %543 = vmatpush1.msra.mxu0 0.0
  %544 = vmatprep.subr.mxu0 0.0
  %545 = vmatpush1.msra.mxu0 0.0
  %546 = vmatprep.subr.mxu0 0.0
  %547 = vmatpush1.msra.mxu0 0.0
  %548 = vmatprep.subr.mxu0 0.0
  %549 = vmatpush1.msra.mxu0 0.0
  %550 = vmatprep.subr.mxu0 0.0
  %551 = vmatpush1.msra.mxu0 0.0
  %552 = vmatprep.subr.mxu0 0.0
  %553 = vmatpush1.msra.mxu0 0.0
  %554 = vmatprep.subr.mxu0 0.0
  %555 = vmatpush1.msra.mxu0 0.0
  %556 = vmatprep.subr.mxu0 0.0
  %557 = vmatpush1.msra.mxu0 0.0
  %558 = vmatprep.subr.mxu0 0.0
  %559 = vmatpush1.msra.mxu0 0.0
  %560 = vmatprep.subr.mxu0 0.0
  %561 = vmatpush1.msra.mxu0 0.0
  %562 = vmatprep.subr.mxu0 0.0
  %563 = vmatpush1.msra.mxu0 0.0
  %564 = vmatprep.subr.mxu0 0.0
  %565 = vmatpush1.msra.mxu0 0.0
  %566 = vmatprep.subr.mxu0 0.0
  %567 = vmatpush1.msra.mxu0 0.0
  %568 = vmatprep.subr.mxu0 0.0
  %569 = vmatpush1.msra.mxu0 0.0
  %570 = vmatprep.subr.mxu0 0.0
  %571 = vmatpush1.msra.mxu0 0.0
  %572 = vmatprep.subr.mxu0 0.0
  %573 = vmatpush1.msra.mxu0 0.0
  %574 = vmatprep.subr.mxu0 0.0
  %575 = vmatpush1.msra.mxu0 0.0
  %576 = vmatprep.subr.mxu0 0.0
  %577 = vmatpush1.msra.mxu0 0.0
  %578 = vmatprep.subr.mxu0 0.0
  %579 = vmatpush1.msra.mxu0 0.0
  %580 = vmatprep.subr.mxu0 0.0
  %581 = vmatpush1.msra.mxu0 0.0
  %582 = vmatprep.subr.mxu0 0.0
  %583 = vmatpush1.msra.mxu0 0.0
  %584 = vmatprep.subr.mxu0 0.0
  %585 = vmatpush1.msra.mxu0 0.0
  %586 = vmatprep.subr.mxu0 0.0
  %587 = vmatpush1.msra.mxu0 0.0
  %588 = vmatprep.subr.mxu0 0.0
  %589 = vmatpush1.msra.mxu0 0.0
  %590 = vmatprep.subr.mxu0 0.0
  %591 = vmatpush1.msra.mxu0 0.0
  %592 = vmatprep.subr.mxu0 0.0
  %593 = vmatpush1.msra.mxu0 0.0
  %594 = vmatprep.subr.mxu0 0.0
  %595 = vmatpush1.msra.mxu0 0.0
  %596 = vmatprep.mubr.f32.mxu0 0.0
  %597 = vmatmul.mubr.f32.gmra.mrb[0].mxu0 %v530
  %v598 = vpop.f32.mrb[0].mxu0
  %v599 = vadd.f32 0.0, %v598
  %v600 = vpop.f32.mrb[0].mxu0
  %601 = vdwg.mxu0
  %v603 = vrot.slane %v599, 4
  %v605 = vsel %vm126, %v525, %v603
  %606 = vxpose.xlu0.b32.start [1/16] %v405, 128
  %607 = vxpose.xlu0.b32.cont [2/16] %v605, 128
  %608 = vxpose.xlu0.b32.cont [3/16] 0.0, 128
  %609 = vxpose.xlu0.b32.cont [4/16] 0.0, 128
  %610 = vxpose.xlu0.b32.cont [5/16] 0.0, 128
  %611 = vxpose.xlu0.b32.cont [6/16] 0.0, 128
  %612 = vxpose.xlu0.b32.cont [7/16] 0.0, 128
  %613 = vxpose.xlu0.b32.cont [8/16] 0.0, 128
  %614 = vxpose.xlu0.b32.cont [9/16] 0.0, 128
  %615 = vxpose.xlu0.b32.cont [10/16] 0.0, 128
  %616 = vxpose.xlu0.b32.cont [11/16] 0.0, 128
  %617 = vxpose.xlu0.b32.cont [12/16] 0.0, 128
  %618 = vxpose.xlu0.b32.cont [13/16] 0.0, 128
  %619 = vxpose.xlu0.b32.cont [14/16] 0.0, 128
  %620 = vxpose.xlu0.b32.cont [15/16] 0.0, 128
  %621 = vxpose.xlu0.b32.end [16/16] 0.0, 128
  %v622 = vpop.trf.xlu0
  %v623 = vpop.trf.xlu0
  %v624 = vpop.trf.xlu0
  %v625 = vpop.trf.xlu0
  %v626 = vpop.trf.xlu0
  %v627 = vpop.trf.xlu0
  %v628 = vpop.trf.xlu0
  %v629 = vpop.trf.xlu0
  %v630 = vpop.trf.xlu0
  %v631 = vpop.trf.xlu0
  %v632 = vpop.trf.xlu0
  %v633 = vpop.trf.xlu0
  %v634 = vpop.trf.xlu0
  %v635 = vpop.trf.xlu0
  %v636 = vpop.trf.xlu0
  %v637 = vpop.trf.xlu0
  %vm638 = vcmask 130048
  %v640 = vsel %vm638, %v622, 0
  %642 = vmatprep.subr.mxu0 %v249
  %643 = vmatpush1.msra.mxu0 %v248
  %644 = vmatprep.subr.mxu0 %v447
  %645 = vmatpush1.msra.mxu0 %v446
  %646 = vmatprep.subr.mxu0 0.0
  %647 = vmatpush1.msra.mxu0 0.0
  %648 = vmatprep.subr.mxu0 0.0
  %649 = vmatpush1.msra.mxu0 0.0
  %650 = vmatprep.subr.mxu0 0.0
  %651 = vmatpush1.msra.mxu0 0.0
  %652 = vmatprep.subr.mxu0 0.0
  %653 = vmatpush1.msra.mxu0 0.0
  %654 = vmatprep.subr.mxu0 0.0
  %655 = vmatpush1.msra.mxu0 0.0
  %656 = vmatprep.subr.mxu0 0.0
  %657 = vmatpush1.msra.mxu0 0.0
  %658 = vmatprep.subr.mxu0 0.0
  %659 = vmatpush1.msra.mxu0 0.0
  %660 = vmatprep.subr.mxu0 0.0
  %661 = vmatpush1.msra.mxu0 0.0
  %662 = vmatprep.subr.mxu0 0.0
  %663 = vmatpush1.msra.mxu0 0.0
  %664 = vmatprep.subr.mxu0 0.0
  %665 = vmatpush1.msra.mxu0 0.0
  %666 = vmatprep.subr.mxu0 0.0
  %667 = vmatpush1.msra.mxu0 0.0
  %668 = vmatprep.subr.mxu0 0.0
  %669 = vmatpush1.msra.mxu0 0.0
  %670 = vmatprep.subr.mxu0 0.0
  %671 = vmatpush1.msra.mxu0 0.0
  %672 = vmatprep.subr.mxu0 0.0
  %673 = vmatpush1.msra.mxu0 0.0
  %674 = vmatprep.subr.mxu0 0.0
  %675 = vmatpush1.msra.mxu0 0.0
  %676 = vmatprep.subr.mxu0 0.0
  %677 = vmatpush1.msra.mxu0 0.0
  %678 = vmatprep.subr.mxu0 0.0
  %679 = vmatpush1.msra.mxu0 0.0
  %680 = vmatprep.subr.mxu0 0.0
  %681 = vmatpush1.msra.mxu0 0.0
  %682 = vmatprep.subr.mxu0 0.0
  %683 = vmatpush1.msra.mxu0 0.0
  %684 = vmatprep.subr.mxu0 0.0
  %685 = vmatpush1.msra.mxu0 0.0
  %686 = vmatprep.subr.mxu0 0.0
  %687 = vmatpush1.msra.mxu0 0.0
  %688 = vmatprep.subr.mxu0 0.0
  %689 = vmatpush1.msra.mxu0 0.0
  %690 = vmatprep.subr.mxu0 0.0
  %691 = vmatpush1.msra.mxu0 0.0
  %692 = vmatprep.subr.mxu0 0.0
  %693 = vmatpush1.msra.mxu0 0.0
  %694 = vmatprep.subr.mxu0 0.0
  %695 = vmatpush1.msra.mxu0 0.0
  %696 = vmatprep.subr.mxu0 0.0
  %697 = vmatpush1.msra.mxu0 0.0
  %698 = vmatprep.subr.mxu0 0.0
  %699 = vmatpush1.msra.mxu0 0.0
  %700 = vmatprep.subr.mxu0 0.0
  %701 = vmatpush1.msra.mxu0 0.0
  %702 = vmatprep.subr.mxu0 0.0
  %703 = vmatpush1.msra.mxu0 0.0
  %704 = vmatprep.subr.mxu0 0.0
  %705 = vmatpush1.msra.mxu0 0.0
  %706 = vmatprep.mubr.f32.mxu0 0.0
  %707 = vmatmul.mubr.f32.gmra.mrb[0].mxu0 %v640
  %v708 = vpop.f32.mrb[0].mxu0
  %v709 = vadd.f32 0.0, %v708
  %v710 = vpop.f32.mrb[0].mxu0
  %v711 = vadd.f32 0.0, %v710
  %712 = vdwg.mxu0
  %v715 = vcombine.low %v709, %v711
  %717 = vst [vmem:[%s5] sm:$0xff] %v715
  %s718 = scalar_lea.vmem %s0, 8
  %v719 = vld [vmem:[%s718] sm:$0xff]
  %721 = vrot.lane.b32.xlu0 %v112, 124
  %v722 = vpop.permute.xlu0 %721
  %v724 = vcombine.high %v719, %v719
  %v725 = vsel %vm121, %v112, 0
  %v727 = vsel %vm121, %v722, 0
  %v729 = vsel %vm126, %v719, 0
  %v731 = vsel %vm126, %v724, 0
  %733 = vmatprep.subr.mxu0 %v731
  %734 = vmatpush1.msra.mxu0 %v729
  %735 = vmatprep.subr.mxu0 0.0
  %736 = vmatpush1.msra.mxu0 0.0
  %737 = vmatprep.subr.mxu0 0.0
  %738 = vmatpush1.msra.mxu0 0.0
  %739 = vmatprep.subr.mxu0 0.0
  %740 = vmatpush1.msra.mxu0 0.0
  %741 = vmatprep.subr.mxu0 0.0
  %742 = vmatpush1.msra.mxu0 0.0
  %743 = vmatprep.subr.mxu0 0.0
  %744 = vmatpush1.msra.mxu0 0.0
  %745 = vmatprep.subr.mxu0 0.0
  %746 = vmatpush1.msra.mxu0 0.0
  %747 = vmatprep.subr.mxu0 0.0
  %748 = vmatpush1.msra.mxu0 0.0
  %749 = vmatprep.subr.mxu0 0.0
  %750 = vmatpush1.msra.mxu0 0.0
  %751 = vmatprep.subr.mxu0 0.0
  %752 = vmatpush1.msra.mxu0 0.0
  %753 = vmatprep.subr.mxu0 0.0
  %754 = vmatpush1.msra.mxu0 0.0
  %755 = vmatprep.subr.mxu0 0.0
  %756 = vmatpush1.msra.mxu0 0.0
  %757 = vmatprep.subr.mxu0 0.0
  %758 = vmatpush1.msra.mxu0 0.0
  %759 = vmatprep.subr.mxu0 0.0
  %760 = vmatpush1.msra.mxu0 0.0
  %761 = vmatprep.subr.mxu0 0.0
  %762 = vmatpush1.msra.mxu0 0.0
  %763 = vmatprep.subr.mxu0 0.0
  %764 = vmatpush1.msra.mxu0 0.0
  %765 = vmatprep.subr.mxu0 0.0
  %766 = vmatpush1.msra.mxu0 0.0
  %767 = vmatprep.subr.mxu0 0.0
  %768 = vmatpush1.msra.mxu0 0.0
  %769 = vmatprep.subr.mxu0 0.0
  %770 = vmatpush1.msra.mxu0 0.0
  %771 = vmatprep.subr.mxu0 0.0
  %772 = vmatpush1.msra.mxu0 0.0
  %773 = vmatprep.subr.mxu0 0.0
  %774 = vmatpush1.msra.mxu0 0.0
  %775 = vmatprep.subr.mxu0 0.0
  %776 = vmatpush1.msra.mxu0 0.0
  %777 = vmatprep.subr.mxu0 0.0
  %778 = vmatpush1.msra.mxu0 0.0
  %779 = vmatprep.subr.mxu0 0.0
  %780 = vmatpush1.msra.mxu0 0.0
  %781 = vmatprep.subr.mxu0 0.0
  %782 = vmatpush1.msra.mxu0 0.0
  %783 = vmatprep.subr.mxu0 0.0
  %784 = vmatpush1.msra.mxu0 0.0
  %785 = vmatprep.subr.mxu0 0.0
  %786 = vmatpush1.msra.mxu0 0.0
  %787 = vmatprep.subr.mxu0 0.0
  %788 = vmatpush1.msra.mxu0 0.0
  %789 = vmatprep.subr.mxu0 0.0
  %790 = vmatpush1.msra.mxu0 0.0
  %791 = vmatprep.subr.mxu0 0.0
  %792 = vmatpush1.msra.mxu0 0.0
  %793 = vmatprep.subr.mxu0 0.0
  %794 = vmatpush1.msra.mxu0 0.0
  %795 = vmatprep.subr.mxu0 0.0
  %796 = vmatpush1.msra.mxu0 0.0
  %797 = vmatprep.mubr.f32.mxu0 0.0
  %798 = vmatmul.mubr.f32.gmra.mrb[0].mxu0 %v725
  %v799 = vpop.f32.mrb[0].mxu0
  %v800 = vadd.f32 0.0, %v799
  %v801 = vpop.f32.mrb[0].mxu0
  %v802 = vadd.f32 0.0, %v801
  %803 = vmatprep.mubr.f32.mxu0 0.0
  %804 = vmatmul.mubr.f32.gmra.mrb[0].mxu0 %v727
  %v805 = vpop.f32.mrb[0].mxu0
  %v806 = vadd.f32 0.0, %v805
  %v807 = vpop.f32.mrb[0].mxu0
  %v808 = vadd.f32 0.0, %v807
  %809 = vdwg.mxu0
  %v812 = vrot.slane %v806, 4
  %v813 = vrot.slane %v808, 4
  %v816 = vsel %vm126, %v800, %v812
  %v817 = vsel %vm126, %v802, %v813
  %v818 = vrot.slane %v816, 4
  %v819 = vmax.f32 %v816, %v818
  %v820 = vrot.slane %v819, 2
  %v821 = vmax.f32 %v819, %v820
  %v822 = vrot.slane %v821, 1
  %v823 = vmax.f32 %v821, %v822
  %v824 = vrot.slane %v817, 4
  %v825 = vmax.f32 %v817, %v824
  %v826 = vrot.slane %v825, 2
  %v827 = vmax.f32 %v825, %v826
  %v828 = vrot.slane %v827, 1
  %v829 = vmax.f32 %v827, %v828
  %v830 = vsub.f32 %v816, %v823
  %v831 = vsub.f32 %v817, %v829
  %v832 = vmul.f32 %v830, 1.442695
  %v833 = vpow.pop %v832
  %v834 = vmul.f32 %v831, 1.442695
  %v835 = vpow.pop %v834
  %v836 = vrot.slane %v833, 4
  %v837 = vadd.f32 %v833, %v836
  %v838 = vrot.slane %v837, 2
  %v839 = vadd.f32 %v837, %v838
  %v840 = vrot.slane %v839, 1
  %v841 = vadd.f32 %v839, %v840
  %v842 = vrot.slane %v835, 4
  %v843 = vadd.f32 %v835, %v842
  %v844 = vrot.slane %v843, 2
  %v845 = vadd.f32 %v843, %v844
  %v846 = vrot.slane %v845, 1
  %v847 = vadd.f32 %v845, %v846
  %v848 = vrcp.pop %v841
  %v849 = vrcp.pop %v847
  %v850 = vmul.f32 %v833, %v848
  %v851 = vmul.f32 %v835, %v849
  %v852 = vld [vmem:[%s4] sm:$0xf]
  %853 = vrot.lane.b32.xlu0 %v112, 120
  %v854 = vpop.permute.xlu0 %853
  %v855 = vsel %vm121, %v854, 0
  %v858 = vsel %vm126, %v852, 0
  %860 = vmatprep.subr.mxu0 0.0
  %861 = vmatpush1.msra.mxu0 %v858
  %862 = vmatprep.subr.mxu0 0.0
  %863 = vmatpush1.msra.mxu0 0.0
  %864 = vmatprep.subr.mxu0 0.0
  %865 = vmatpush1.msra.mxu0 0.0
  %866 = vmatprep.subr.mxu0 0.0
  %867 = vmatpush1.msra.mxu0 0.0
  %868 = vmatprep.subr.mxu0 0.0
  %869 = vmatpush1.msra.mxu0 0.0
  %870 = vmatprep.subr.mxu0 0.0
  %871 = vmatpush1.msra.mxu0 0.0
  %872 = vmatprep.subr.mxu0 0.0
  %873 = vmatpush1.msra.mxu0 0.0
  %874 = vmatprep.subr.mxu0 0.0
  %875 = vmatpush1.msra.mxu0 0.0
  %876 = vmatprep.subr.mxu0 0.0
  %877 = vmatpush1.msra.mxu0 0.0
  %878 = vmatprep.subr.mxu0 0.0
  %879 = vmatpush1.msra.mxu0 0.0
  %880 = vmatprep.subr.mxu0 0.0
  %881 = vmatpush1.msra.mxu0 0.0
  %882 = vmatprep.subr.mxu0 0.0
  %883 = vmatpush1.msra.mxu0 0.0
  %884 = vmatprep.subr.mxu0 0.0
  %885 = vmatpush1.msra.mxu0 0.0
  %886 = vmatprep.subr.mxu0 0.0
  %887 = vmatpush1.msra.mxu0 0.0
  %888 = vmatprep.subr.mxu0 0.0
  %889 = vmatpush1.msra.mxu0 0.0
  %890 = vmatprep.subr.mxu0 0.0
  %891 = vmatpush1.msra.mxu0 0.0
  %892 = vmatprep.subr.mxu0 0.0
  %893 = vmatpush1.msra.mxu0 0.0
  %894 = vmatprep.subr.mxu0 0.0
  %895 = vmatpush1.msra.mxu0 0.0
  %896 = vmatprep.subr.mxu0 0.0
  %897 = vmatpush1.msra.mxu0 0.0
  %898 = vmatprep.subr.mxu0 0.0
  %899 = vmatpush1.msra.mxu0 0.0
  %900 = vmatprep.subr.mxu0 0.0
  %901 = vmatpush1.msra.mxu0 0.0
  %902 = vmatprep.subr.mxu0 0.0
  %903 = vmatpush1.msra.mxu0 0.0
  %904 = vmatprep.subr.mxu0 0.0
  %905 = vmatpush1.msra.mxu0 0.0
  %906 = vmatprep.subr.mxu0 0.0
  %907 = vmatpush1.msra.mxu0 0.0
  %908 = vmatprep.subr.mxu0 0.0
  %909 = vmatpush1.msra.mxu0 0.0
  %910 = vmatprep.subr.mxu0 0.0
  %911 = vmatpush1.msra.mxu0 0.0
  %912 = vmatprep.subr.mxu0 0.0
  %913 = vmatpush1.msra.mxu0 0.0
  %914 = vmatprep.subr.mxu0 0.0
  %915 = vmatpush1.msra.mxu0 0.0
  %916 = vmatprep.subr.mxu0 0.0
  %917 = vmatpush1.msra.mxu0 0.0
  %918 = vmatprep.subr.mxu0 0.0
  %919 = vmatpush1.msra.mxu0 0.0
  %920 = vmatprep.subr.mxu0 0.0
  %921 = vmatpush1.msra.mxu0 0.0
  %922 = vmatprep.subr.mxu0 0.0
  %923 = vmatpush1.msra.mxu0 0.0
  %924 = vmatprep.mubr.f32.mxu0 0.0
  %925 = vmatmul.mubr.f32.gmra.mrb[0].mxu0 %v855
  %v926 = vpop.f32.mrb[0].mxu0
  %v927 = vadd.f32 0.0, %v926
  %v928 = vpop.f32.mrb[0].mxu0
  %929 = vdwg.mxu0
  %930 = vrot.lane.b32.xlu0 %v112, 116
  %v931 = vpop.permute.xlu0 %930
  %v932 = vsel %vm121, %v931, 0
  %934 = vmatprep.subr.mxu0 0.0
  %935 = vmatpush1.msra.mxu0 %v858
  %936 = vmatprep.subr.mxu0 0.0
  %937 = vmatpush1.msra.mxu0 0.0
  %938 = vmatprep.subr.mxu0 0.0
  %939 = vmatpush1.msra.mxu0 0.0
  %940 = vmatprep.subr.mxu0 0.0
  %941 = vmatpush1.msra.mxu0 0.0
  %942 = vmatprep.subr.mxu0 0.0
  %943 = vmatpush1.msra.mxu0 0.0
  %944 = vmatprep.subr.mxu0 0.0
  %945 = vmatpush1.msra.mxu0 0.0
  %946 = vmatprep.subr.mxu0 0.0
  %947 = vmatpush1.msra.mxu0 0.0
  %948 = vmatprep.subr.mxu0 0.0
  %949 = vmatpush1.msra.mxu0 0.0
  %950 = vmatprep.subr.mxu0 0.0
  %951 = vmatpush1.msra.mxu0 0.0
  %952 = vmatprep.subr.mxu0 0.0
  %953 = vmatpush1.msra.mxu0 0.0
  %954 = vmatprep.subr.mxu0 0.0
  %955 = vmatpush1.msra.mxu0 0.0
  %956 = vmatprep.subr.mxu0 0.0
  %957 = vmatpush1.msra.mxu0 0.0
  %958 = vmatprep.subr.mxu0 0.0
  %959 = vmatpush1.msra.mxu0 0.0
  %960 = vmatprep.subr.mxu0 0.0
  %961 = vmatpush1.msra.mxu0 0.0
  %962 = vmatprep.subr.mxu0 0.0
  %963 = vmatpush1.msra.mxu0 0.0
  %964 = vmatprep.subr.mxu0 0.0
  %965 = vmatpush1.msra.mxu0 0.0
  %966 = vmatprep.subr.mxu0 0.0
  %967 = vmatpush1.msra.mxu0 0.0
  %968 = vmatprep.subr.mxu0 0.0
  %969 = vmatpush1.msra.mxu0 0.0
  %970 = vmatprep.subr.mxu0 0.0
  %971 = vmatpush1.msra.mxu0 0.0
  %972 = vmatprep.subr.mxu0 0.0
  %973 = vmatpush1.msra.mxu0 0.0
  %974 = vmatprep.subr.mxu0 0.0
  %975 = vmatpush1.msra.mxu0 0.0
  %976 = vmatprep.subr.mxu0 0.0
  %977 = vmatpush1.msra.mxu0 0.0
  %978 = vmatprep.subr.mxu0 0.0
  %979 = vmatpush1.msra.mxu0 0.0
  %980 = vmatprep.subr.mxu0 0.0
  %981 = vmatpush1.msra.mxu0 0.0
  %982 = vmatprep.subr.mxu0 0.0
  %983 = vmatpush1.msra.mxu0 0.0
  %984 = vmatprep.subr.mxu0 0.0
  %985 = vmatpush1.msra.mxu0 0.0
  %986 = vmatprep.subr.mxu0 0.0
  %987 = vmatpush1.msra.mxu0 0.0
  %988 = vmatprep.subr.mxu0 0.0
  %989 = vmatpush1.msra.mxu0 0.0
  %990 = vmatprep.subr.mxu0 0.0
  %991 = vmatpush1.msra.mxu0 0.0
  %992 = vmatprep.subr.mxu0 0.0
  %993 = vmatpush1.msra.mxu0 0.0
  %994 = vmatprep.subr.mxu0 0.0
  %995 = vmatpush1.msra.mxu0 0.0
  %996 = vmatprep.subr.mxu0 0.0
  %997 = vmatpush1.msra.mxu0 0.0
  %998 = vmatprep.mubr.f32.mxu0 0.0
  %999 = vmatmul.mubr.f32.gmra.mrb[0].mxu0 %v932
  %v1000 = vpop.f32.mrb[0].mxu0
  %v1001 = vadd.f32 0.0, %v1000
  %v1002 = vpop.f32.mrb[0].mxu0
  %1003 = vdwg.mxu0
  %v1005 = vrot.slane %v1001, 4
  %v1007 = vsel %vm126, %v927, %v1005
  %v1010 = vrot.slane %v800, 4
  %v1011 = vrot.slane %v802, 4
  %v1014 = vsel %vm126, %v1010, %v806
  %v1015 = vsel %vm126, %v1011, %v808
  %v1016 = vrot.slane %v1014, 4
  %v1017 = vmax.f32 %v1014, %v1016
  %v1018 = vrot.slane %v1017, 2
  %v1019 = vmax.f32 %v1017, %v1018
  %v1020 = vrot.slane %v1019, 1
  %v1021 = vmax.f32 %v1019, %v1020
  %v1022 = vrot.slane %v1015, 4
  %v1023 = vmax.f32 %v1015, %v1022
  %v1024 = vrot.slane %v1023, 2
  %v1025 = vmax.f32 %v1023, %v1024
  %v1026 = vrot.slane %v1025, 1
  %v1027 = vmax.f32 %v1025, %v1026
  %v1028 = vsub.f32 %v1014, %v1021
  %v1029 = vsub.f32 %v1015, %v1027
  %v1030 = vmul.f32 %v1028, 1.442695
  %v1031 = vpow.pop %v1030
  %v1032 = vmul.f32 %v1029, 1.442695
  %v1033 = vpow.pop %v1032
  %v1034 = vrot.slane %v1031, 4
  %v1035 = vadd.f32 %v1031, %v1034
  %v1036 = vrot.slane %v1035, 2
  %v1037 = vadd.f32 %v1035, %v1036
  %v1038 = vrot.slane %v1037, 1
  %v1039 = vadd.f32 %v1037, %v1038
  %v1040 = vrot.slane %v1033, 4
  %v1041 = vadd.f32 %v1033, %v1040
  %v1042 = vrot.slane %v1041, 2
  %v1043 = vadd.f32 %v1041, %v1042
  %v1044 = vrot.slane %v1043, 1
  %v1045 = vadd.f32 %v1043, %v1044
  %v1046 = vrcp.pop %v1039
  %v1047 = vrcp.pop %v1045
  %v1048 = vmul.f32 %v1031, %v1046
  %v1049 = vmul.f32 %v1033, %v1047
  %v1050 = vld [vmem:[%s448] sm:$0xf]
  %v1051 = vrot.slane %v112, 4
  %1052 = vrot.lane.b32.xlu0 %v1051, 120
  %v1053 = vpop.permute.xlu0 %1052
  %v1054 = vsel %vm121, %v1053, 0
  %v1057 = vsel %vm126, %v1050, 0
  %1059 = vmatprep.subr.mxu0 0.0
  %1060 = vmatpush1.msra.mxu0 %v1057
  %1061 = vmatprep.subr.mxu0 0.0
  %1062 = vmatpush1.msra.mxu0 0.0
  %1063 = vmatprep.subr.mxu0 0.0
  %1064 = vmatpush1.msra.mxu0 0.0
  %1065 = vmatprep.subr.mxu0 0.0
  %1066 = vmatpush1.msra.mxu0 0.0
  %1067 = vmatprep.subr.mxu0 0.0
  %1068 = vmatpush1.msra.mxu0 0.0
  %1069 = vmatprep.subr.mxu0 0.0
  %1070 = vmatpush1.msra.mxu0 0.0
  %1071 = vmatprep.subr.mxu0 0.0
  %1072 = vmatpush1.msra.mxu0 0.0
  %1073 = vmatprep.subr.mxu0 0.0
  %1074 = vmatpush1.msra.mxu0 0.0
  %1075 = vmatprep.subr.mxu0 0.0
  %1076 = vmatpush1.msra.mxu0 0.0
  %1077 = vmatprep.subr.mxu0 0.0
  %1078 = vmatpush1.msra.mxu0 0.0
  %1079 = vmatprep.subr.mxu0 0.0
  %1080 = vmatpush1.msra.mxu0 0.0
  %1081 = vmatprep.subr.mxu0 0.0
  %1082 = vmatpush1.msra.mxu0 0.0
  %1083 = vmatprep.subr.mxu0 0.0
  %1084 = vmatpush1.msra.mxu0 0.0
  %1085 = vmatprep.subr.mxu0 0.0
  %1086 = vmatpush1.msra.mxu0 0.0
  %1087 = vmatprep.subr.mxu0 0.0
  %1088 = vmatpush1.msra.mxu0 0.0
  %1089 = vmatprep.subr.mxu0 0.0
  %1090 = vmatpush1.msra.mxu0 0.0
  %1091 = vmatprep.subr.mxu0 0.0
  %1092 = vmatpush1.msra.mxu0 0.0
  %1093 = vmatprep.subr.mxu0 0.0
  %1094 = vmatpush1.msra.mxu0 0.0
  %1095 = vmatprep.subr.mxu0 0.0
  %1096 = vmatpush1.msra.mxu0 0.0
  %1097 = vmatprep.subr.mxu0 0.0
  %1098 = vmatpush1.msra.mxu0 0.0
  %1099 = vmatprep.subr.mxu0 0.0
  %1100 = vmatpush1.msra.mxu0 0.0
  %1101 = vmatprep.subr.mxu0 0.0
  %1102 = vmatpush1.msra.mxu0 0.0
  %1103 = vmatprep.subr.mxu0 0.0
  %1104 = vmatpush1.msra.mxu0 0.0
  %1105 = vmatprep.subr.mxu0 0.0
  %1106 = vmatpush1.msra.mxu0 0.0
  %1107 = vmatprep.subr.mxu0 0.0
  %1108 = vmatpush1.msra.mxu0 0.0
  %1109 = vmatprep.subr.mxu0 0.0
  %1110 = vmatpush1.msra.mxu0 0.0
  %1111 = vmatprep.subr.mxu0 0.0
  %1112 = vmatpush1.msra.mxu0 0.0
  %1113 = vmatprep.subr.mxu0 0.0
  %1114 = vmatpush1.msra.mxu0 0.0
  %1115 = vmatprep.subr.mxu0 0.0
  %1116 = vmatpush1.msra.mxu0 0.0
  %1117 = vmatprep.subr.mxu0 0.0
  %1118 = vmatpush1.msra.mxu0 0.0
  %1119 = vmatprep.subr.mxu0 0.0
  %1120 = vmatpush1.msra.mxu0 0.0
  %1121 = vmatprep.subr.mxu0 0.0
  %1122 = vmatpush1.msra.mxu0 0.0
  %1123 = vmatprep.mubr.f32.mxu0 0.0
  %1124 = vmatmul.mubr.f32.gmra.mrb[0].mxu0 %v1054
  %v1125 = vpop.f32.mrb[0].mxu0
  %v1126 = vadd.f32 0.0, %v1125
  %v1127 = vpop.f32.mrb[0].mxu0
  %1128 = vdwg.mxu0
  %1129 = vrot.lane.b32.xlu0 %v1051, 116
  %v1130 = vpop.permute.xlu0 %1129
  %v1131 = vsel %vm121, %v1130, 0
  %1133 = vmatprep.subr.mxu0 0.0
  %1134 = vmatpush1.msra.mxu0 %v1057
  %1135 = vmatprep.subr.mxu0 0.0
  %1136 = vmatpush1.msra.mxu0 0.0
  %1137 = vmatprep.subr.mxu0 0.0
  %1138 = vmatpush1.msra.mxu0 0.0
  %1139 = vmatprep.subr.mxu0 0.0
  %1140 = vmatpush1.msra.mxu0 0.0
  %1141 = vmatprep.subr.mxu0 0.0
  %1142 = vmatpush1.msra.mxu0 0.0
  %1143 = vmatprep.subr.mxu0 0.0
  %1144 = vmatpush1.msra.mxu0 0.0
  %1145 = vmatprep.subr.mxu0 0.0
  %1146 = vmatpush1.msra.mxu0 0.0
  %1147 = vmatprep.subr.mxu0 0.0
  %1148 = vmatpush1.msra.mxu0 0.0
  %1149 = vmatprep.subr.mxu0 0.0
  %1150 = vmatpush1.msra.mxu0 0.0
  %1151 = vmatprep.subr.mxu0 0.0
  %1152 = vmatpush1.msra.mxu0 0.0
  %1153 = vmatprep.subr.mxu0 0.0
  %1154 = vmatpush1.msra.mxu0 0.0
  %1155 = vmatprep.subr.mxu0 0.0
  %1156 = vmatpush1.msra.mxu0 0.0
  %1157 = vmatprep.subr.mxu0 0.0
  %1158 = vmatpush1.msra.mxu0 0.0
  %1159 = vmatprep.subr.mxu0 0.0
  %1160 = vmatpush1.msra.mxu0 0.0
  %1161 = vmatprep.subr.mxu0 0.0
  %1162 = vmatpush1.msra.mxu0 0.0
  %1163 = vmatprep.subr.mxu0 0.0
  %1164 = vmatpush1.msra.mxu0 0.0
  %1165 = vmatprep.subr.mxu0 0.0
  %1166 = vmatpush1.msra.mxu0 0.0
  %1167 = vmatprep.subr.mxu0 0.0
  %1168 = vmatpush1.msra.mxu0 0.0
  %1169 = vmatprep.subr.mxu0 0.0
  %1170 = vmatpush1.msra.mxu0 0.0
  %1171 = vmatprep.subr.mxu0 0.0
  %1172 = vmatpush1.msra.mxu0 0.0
  %1173 = vmatprep.subr.mxu0 0.0
  %1174 = vmatpush1.msra.mxu0 0.0
  %1175 = vmatprep.subr.mxu0 0.0
  %1176 = vmatpush1.msra.mxu0 0.0
  %1177 = vmatprep.subr.mxu0 0.0
  %1178 = vmatpush1.msra.mxu0 0.0
  %1179 = vmatprep.subr.mxu0 0.0
  %1180 = vmatpush1.msra.mxu0 0.0
  %1181 = vmatprep.subr.mxu0 0.0
  %1182 = vmatpush1.msra.mxu0 0.0
  %1183 = vmatprep.subr.mxu0 0.0
  %1184 = vmatpush1.msra.mxu0 0.0
  %1185 = vmatprep.subr.mxu0 0.0
  %1186 = vmatpush1.msra.mxu0 0.0
  %1187 = vmatprep.subr.mxu0 0.0
  %1188 = vmatpush1.msra.mxu0 0.0
  %1189 = vmatprep.subr.mxu0 0.0
  %1190 = vmatpush1.msra.mxu0 0.0
  %1191 = vmatprep.subr.mxu0 0.0
  %1192 = vmatpush1.msra.mxu0 0.0
  %1193 = vmatprep.subr.mxu0 0.0
  %1194 = vmatpush1.msra.mxu0 0.0
  %1195 = vmatprep.subr.mxu0 0.0
  %1196 = vmatpush1.msra.mxu0 0.0
  %1197 = vmatprep.mubr.f32.mxu0 0.0
  %1198 = vmatmul.mubr.f32.gmra.mrb[0].mxu0 %v1131
  %v1199 = vpop.f32.mrb[0].mxu0
  %v1200 = vadd.f32 0.0, %v1199
  %v1201 = vpop.f32.mrb[0].mxu0
  %1202 = vdwg.mxu0
  %v1204 = vrot.slane %v1200, 4
  %v1206 = vsel %vm126, %v1126, %v1204
  %1207 = vxpose.xlu0.b32.start [1/16] %v1007, 128
  %1208 = vxpose.xlu0.b32.cont [2/16] %v1206, 128
  %1209 = vxpose.xlu0.b32.cont [3/16] 0.0, 128
  %1210 = vxpose.xlu0.b32.cont [4/16] 0.0, 128
  %1211 = vxpose.xlu0.b32.cont [5/16] 0.0, 128
  %1212 = vxpose.xlu0.b32.cont [6/16] 0.0, 128
  %1213 = vxpose.xlu0.b32.cont [7/16] 0.0, 128
  %1214 = vxpose.xlu0.b32.cont [8/16] 0.0, 128
  %1215 = vxpose.xlu0.b32.cont [9/16] 0.0, 128
  %1216 = vxpose.xlu0.b32.cont [10/16] 0.0, 128
  %1217 = vxpose.xlu0.b32.cont [11/16] 0.0, 128
  %1218 = vxpose.xlu0.b32.cont [12/16] 0.0, 128
  %1219 = vxpose.xlu0.b32.cont [13/16] 0.0, 128
  %1220 = vxpose.xlu0.b32.cont [14/16] 0.0, 128
  %1221 = vxpose.xlu0.b32.cont [15/16] 0.0, 128
  %1222 = vxpose.xlu0.b32.end [16/16] 0.0, 128
  %v1223 = vpop.trf.xlu0
  %v1224 = vpop.trf.xlu0
  %v1225 = vpop.trf.xlu0
  %v1226 = vpop.trf.xlu0
  %v1227 = vpop.trf.xlu0
  %v1228 = vpop.trf.xlu0
  %v1229 = vpop.trf.xlu0
  %v1230 = vpop.trf.xlu0
  %v1231 = vpop.trf.xlu0
  %v1232 = vpop.trf.xlu0
  %v1233 = vpop.trf.xlu0
  %v1234 = vpop.trf.xlu0
  %v1235 = vpop.trf.xlu0
  %v1236 = vpop.trf.xlu0
  %v1237 = vpop.trf.xlu0
  %v1238 = vpop.trf.xlu0
  %v1240 = vsel %vm638, %v1223, 0
  %1242 = vmatprep.subr.mxu0 %v851
  %1243 = vmatpush1.msra.mxu0 %v850
  %1244 = vmatprep.subr.mxu0 %v1049
  %1245 = vmatpush1.msra.mxu0 %v1048
  %1246 = vmatprep.subr.mxu0 0.0
  %1247 = vmatpush1.msra.mxu0 0.0
  %1248 = vmatprep.subr.mxu0 0.0
  %1249 = vmatpush1.msra.mxu0 0.0
  %1250 = vmatprep.subr.mxu0 0.0
  %1251 = vmatpush1.msra.mxu0 0.0
  %1252 = vmatprep.subr.mxu0 0.0
  %1253 = vmatpush1.msra.mxu0 0.0
  %1254 = vmatprep.subr.mxu0 0.0
  %1255 = vmatpush1.msra.mxu0 0.0
  %1256 = vmatprep.subr.mxu0 0.0
  %1257 = vmatpush1.msra.mxu0 0.0
  %1258 = vmatprep.subr.mxu0 0.0
  %1259 = vmatpush1.msra.mxu0 0.0
  %1260 = vmatprep.subr.mxu0 0.0
  %1261 = vmatpush1.msra.mxu0 0.0
  %1262 = vmatprep.subr.mxu0 0.0
  %1263 = vmatpush1.msra.mxu0 0.0
  %1264 = vmatprep.subr.mxu0 0.0
  %1265 = vmatpush1.msra.mxu0 0.0
  %1266 = vmatprep.subr.mxu0 0.0
  %1267 = vmatpush1.msra.mxu0 0.0
  %1268 = vmatprep.subr.mxu0 0.0
  %1269 = vmatpush1.msra.mxu0 0.0
  %1270 = vmatprep.subr.mxu0 0.0
  %1271 = vmatpush1.msra.mxu0 0.0
  %1272 = vmatprep.subr.mxu0 0.0
  %1273 = vmatpush1.msra.mxu0 0.0
  %1274 = vmatprep.subr.mxu0 0.0
  %1275 = vmatpush1.msra.mxu0 0.0
  %1276 = vmatprep.subr.mxu0 0.0
  %1277 = vmatpush1.msra.mxu0 0.0
  %1278 = vmatprep.subr.mxu0 0.0
  %1279 = vmatpush1.msra.mxu0 0.0
  %1280 = vmatprep.subr.mxu0 0.0
  %1281 = vmatpush1.msra.mxu0 0.0
  %1282 = vmatprep.subr.mxu0 0.0
  %1283 = vmatpush1.msra.mxu0 0.0
  %1284 = vmatprep.subr.mxu0 0.0
  %1285 = vmatpush1.msra.mxu0 0.0
  %1286 = vmatprep.subr.mxu0 0.0
  %1287 = vmatpush1.msra.mxu0 0.0
  %1288 = vmatprep.subr.mxu0 0.0
  %1289 = vmatpush1.msra.mxu0 0.0
  %1290 = vmatprep.subr.mxu0 0.0
  %1291 = vmatpush1.msra.mxu0 0.0
  %1292 = vmatprep.subr.mxu0 0.0
  %1293 = vmatpush1.msra.mxu0 0.0
  %1294 = vmatprep.subr.mxu0 0.0
  %1295 = vmatpush1.msra.mxu0 0.0
  %1296 = vmatprep.subr.mxu0 0.0
  %1297 = vmatpush1.msra.mxu0 0.0
  %1298 = vmatprep.subr.mxu0 0.0
  %1299 = vmatpush1.msra.mxu0 0.0
  %1300 = vmatprep.subr.mxu0 0.0
  %1301 = vmatpush1.msra.mxu0 0.0
  %1302 = vmatprep.subr.mxu0 0.0
  %1303 = vmatpush1.msra.mxu0 0.0
  %1304 = vmatprep.subr.mxu0 0.0
  %1305 = vmatpush1.msra.mxu0 0.0
  %1306 = vmatprep.mubr.f32.mxu0 0.0
  %1307 = vmatmul.mubr.f32.gmra.mrb[0].mxu0 %v1240
  %v1308 = vpop.f32.mrb[0].mxu0
  %v1309 = vadd.f32 0.0, %v1308
  %v1310 = vpop.f32.mrb[0].mxu0
  %v1311 = vadd.f32 0.0, %v1310
  %1312 = vdwg.mxu0
  %v1315 = vcombine.low %v1309, %v1311
  %s1317 = scalar_lea.vmem %s5, 8
  %1318 = vst [vmem:[%s1317] sm:$0xff] %v1315
  // Predicated region
  $region22: #{former2mobile_forward.1} parent=0 // pred_check
    _
  $region23: #{former2mobile_forward.1} parent=0 // pred_check_branch
    %1320 = sbr.rel (0) target = $region25
  $region24: #{former2mobile_forward.1} parent=0 // pred_region
    _
  $region25: #{former2mobile_forward.1} parent=0 // pred_fallthru
    _
  // Predicated region
  $region26: #{former2mobile_forward.1} parent=0 // pred_check
    _
  $region27: #{former2mobile_forward.1} parent=0 // pred_check_branch
    %1322 = sbr.rel (0) target = $region29
  $region28: #{former2mobile_forward.1} parent=0 // pred_region
    _
  $region29: #{former2mobile_forward.1} parent=0 // pred_fallthru
    _

</llo_original>
